<compile_context>
chip_gen: v6e
topology: v6e:2x2x1
jax: 0.10.0
libtpu: 0.0.40
codegen_flags: <defaults>
</compile_context>

<pallas_src>
import numpy as np
import jax
import jax.numpy as jnp
from jax.experimental import pallas as pl
from jax.experimental.pallas import tpu as pltpu


def graph_lstm_kernel(xs_ref,    # (E_pad, D)        gathered source inputs
                      w_ref,     # (3*D, E_pad, H)   per-edge gate weights, row = gate*D + d
                      b_ref,     # (3, E_pad, H)     per-edge gate biases (b_ih + b_hh)
                      s_ref,     # (MN, E_pad)       weighted one-hot scatter matrix
                      cwt_ref,   # (H, O)            1x1 conv weight, transposed
                      cb_ref,    # (1, O)            1x1 conv bias
                      out_ref):  # (MN, O)
    E_pad, D = xs_ref.shape
    H = cwt_ref.shape[0]

    xs = xs_ref[...]                                                   # (E_pad, D)
    # Broadcast each input channel across the H lanes once (reused by all 3 gates).
    xcols = [jnp.broadcast_to(xs[:, d:d + 1], (E_pad, H)) for d in range(D)]

    def gate(k):                                                       # (E_pad, H)
        acc = b_ref[k]
        for d in range(D):                                             # D = 4, static unroll
            acc = acc + xcols[d] * w_ref[k * D + d]
        return acc

    # LSTM cell with zero initial state (module calls reset() before the sequence):
    # forget gate * c_prev == 0, so only i, g, o are computed.
    i_g = jax.nn.sigmoid(gate(0))
    g_g = jnp.tanh(gate(1))
    o_g = jax.nn.sigmoid(gate(2))
    h = o_g * jnp.tanh(i_g * g_g)                                      # (E_pad, H)

    # Weighted scatter of all edge outputs into the frame: one MXU matmul replaces
    # E read-modify-writes of an (MN, H) accumulator.
    frame = jnp.dot(s_ref[...], h, preferred_element_type=jnp.float32)  # (MN, H)

    # 1x1 conv == matmul over the channel dim, + bias.
    out_ref[...] = (jnp.dot(frame, cwt_ref[...],
                            preferred_element_type=jnp.float32) + cb_ref[...])


def graph_lstm_forward(x, src_idx, tgt_idx, edge_w, w_ih, bias, conv_w, conv_b):
    """x: (1, D, M, N) float32 (NCHW).  Returns (1, O, M, N)."""
    B, D, M, N = x.shape
    assert B == 1  # the module's in-place accumulation is only well-defined for batch 1
    MN = M * N
    E, H4 = bias.shape
    H = H4 // 4
    O = conv_w.shape[0]
    E_pad = int(-(-E // 8) * 8)                                # round up to sublane multiple

    # Gather the source pixel input for every edge in the wrapper (removes the
    # per-edge in-kernel one-hot gather entirely).
    x_flat = x[0].reshape(D, MN).T.astype(jnp.float32)         # (MN, D)
    xs = jnp.pad(x_flat[src_idx], ((0, E_pad - E), (0, 0)))    # (E_pad, D)

    # Keep only the i, g, o gate slabs (PyTorch gate order is i, f, g, o; the forget
    # gate is dead because c_prev == 0), laid out so the kernel indexes a leading axis
    # instead of lane-slicing a 128-lane vreg at 32-lane boundaries.
    gate_slices = (slice(0, H), slice(2 * H, 3 * H), slice(3 * H, 4 * H))
    w_g = jnp.stack([w_ih[:, s, :] for s in gate_slices])      # (3, E, H, D)
    w_g = jnp.transpose(w_g, (0, 3, 1, 2))                     # (3, D, E, H)
    w_g = jnp.pad(w_g, ((0, 0), (0, 0), (0, E_pad - E), (0, 0)))
    w_g = w_g.reshape(3 * D, E_pad, H).astype(jnp.float32)     # (3*D, E_pad, H)

    b_g = jnp.stack([bias[:, s] for s in gate_slices])         # (3, E, H)
    b_g = jnp.pad(b_g, ((0, 0), (0, E_pad - E), (0, 0))).astype(jnp.float32)

    # Weighted scatter matrix: frame = S @ h.  Edge weight folded into the one-hot;
    # padded edge columns are zero so padding never contributes.
    S = (jnp.arange(MN)[:, None] == tgt_idx[None, :]).astype(jnp.float32) * edge_w[None, :]
    S = jnp.pad(S, ((0, 0), (0, E_pad - E)))                   # (MN, E_pad)

    cwt = conv_w.T.astype(jnp.float32)                         # (H, O)
    cb2 = conv_b.reshape(1, O).astype(jnp.float32)             # (1, O)

    cost = pl.CostEstimate(
        flops=(2 * 3 * D * E_pad * H          # gate multiply-accumulate (VPU)
               + 10 * E_pad * H               # gate elementwise combine
               + 2 * MN * E_pad * H           # scatter matmul
               + 2 * MN * H * O),             # 1x1 conv matmul
        transcendentals=4 * E_pad * H,        # 2x sigmoid + 2x tanh per (edge, hidden)
        bytes_accessed=4 * (xs.size + w_g.size + b_g.size + S.size
                            + cwt.size + cb2.size + MN * O),
    )

    out_flat = pl.pallas_call(
        graph_lstm_kernel,
        out_shape=jax.ShapeDtypeStruct((MN, O), jnp.float32),
        grid=(1,),
        in_specs=[
            pl.BlockSpec((E_pad, D), lambda i: (0, 0)),              # xs
            pl.BlockSpec((3 * D, E_pad, H), lambda i: (0, 0, 0)),    # gate weights
            pl.BlockSpec((3, E_pad, H), lambda i: (0, 0, 0)),        # gate biases
            pl.BlockSpec((MN, E_pad), lambda i: (0, 0)),             # scatter matrix
            pl.BlockSpec((H, O), lambda i: (0, 0)),                  # conv weight^T
            pl.BlockSpec((1, O), lambda i: (0, 0)),                  # conv bias
        ],
        out_specs=pl.BlockSpec((MN, O), lambda i: (0, 0)),
        compiler_params=pltpu.CompilerParams(dimension_semantics=("arbitrary",)),
        cost_estimate=cost,
    )(xs, w_g, b_g, S, cwt, cb2)

    return out_flat.T.reshape(O, M, N)[None]                   # (1, O, M, N)


def reference_forward(x, src_idx, tgt_idx, edge_w, w_ih, bias, conv_w, conv_b):
    """Pure-JAX reference mirroring the PyTorch forward (zero LSTM state)."""
    B, D, M, N = x.shape
    MN = M * N
    H = bias.shape[1] // 4
    O = conv_w.shape[0]
    x_flat = x[0].reshape(D, MN).T                                        # (MN, D)
    gates = jnp.einsum('ed,ehd->eh', x_flat[src_idx], w_ih) + bias        # (E, 4H)
    i_g = jax.nn.sigmoid(gates[:, 0:H])
    g_g = jnp.tanh(gates[:, 2 * H:3 * H])
    o_g = jax.nn.sigmoid(gates[:, 3 * H:4 * H])
    h = o_g * jnp.tanh(i_g * g_g)                                         # (E, H)
    frame = jnp.zeros((MN, H), jnp.float32).at[tgt_idx].add(edge_w[:, None] * h)
    out = frame @ conv_w.T + conv_b[None, :]                              # (MN, O)
    return out.T.reshape(O, M, N)[None]


if __name__ == "__main__":
    # Model configuration (small, consistent with the module's params dict).
    params = dict(input_size=(4, 4), input_dim=4, hidden_dim=32, output_dim=4)
    M, N = params['input_size']
    MN = M * N
    D, H, O = params['input_dim'], params['hidden_dim'], params['output_dim']

    key = jax.random.PRNGKey(0)
    k_graph, k_x, k_model = jax.random.split(key, 3)

    # Synthetic deterministic connection graph (the PyTorch module loads a pickle).
    graph = jax.random.uniform(k_graph, (MN, MN), minval=-1.0, maxval=1.0)
    graph = jnp.where((graph > -0.5) & (graph < 0.5), 0.0, graph)
    graph_np = np.asarray(graph, dtype=np.float32)

    # Build edge list exactly as __construct_net + forward do:
    # one "self" LSTM per node (weight graph[i,i]) plus one LSTM per nonzero graph[i,j].
    src_l, tgt_l, w_l = [], [], []
    for i in range(MN):
        src_l.append(i); tgt_l.append(i); w_l.append(graph_np[i, i])
        for j in range(MN):
            if graph_np[i, j] != 0:
                src_l.append(j); tgt_l.append(i); w_l.append(graph_np[i, j])
    E = len(src_l)
    src_idx = jnp.asarray(src_l, jnp.int32)
    tgt_idx = jnp.asarray(tgt_l, jnp.int32)
    edge_w = jnp.asarray(w_l, jnp.float32)

    # Per-edge LSTM parameters, U(-1/sqrt(H), 1/sqrt(H)) like torch's LSTM init.
    k1, k2, k3, k4, k5 = jax.random.split(k_model, 5)
    bound = 1.0 / np.sqrt(H)
    w_ih = jax.random.uniform(k1, (E, 4 * H, D), minval=-bound, maxval=bound,
                              dtype=jnp.float32)
    b_ih = jax.random.uniform(k2, (E, 4 * H), minval=-bound, maxval=bound,
                              dtype=jnp.float32)
    b_hh = jax.random.uniform(k3, (E, 4 * H), minval=-bound, maxval=bound,
                              dtype=jnp.float32)
    # TODO(synk): the recurrent term W_hh @ h_prev is omitted: the module calls
    # reset() before each sequence, so h_prev = c_prev = 0 for this forward step.
    bias = b_ih + b_hh                            # (E, 4H)

    conv_w = jax.random.uniform(k4, (O, H), minval=-bound, maxval=bound,
                                dtype=jnp.float32)
    conv_b = jax.random.uniform(k5, (O,), minval=-bound, maxval=bound,
                                dtype=jnp.float32)

    # Input (B=1, D, M, N) — the PyTorch forward is only well-defined for batch 1.
    x = jax.random.normal(k_x, (1, D, M, N), dtype=jnp.float32)

    out = graph_lstm_forward(x, src_idx, tgt_idx, edge_w, w_ih, bias, conv_w, conv_b)
    out = jax.block_until_ready(out)

    ref = reference_forward(x, src_idx, tgt_idx, edge_w, w_ih, bias, conv_w, conv_b)
    np.testing.assert_allclose(np.asarray(out), np.asarray(ref), rtol=1e-3, atol=1e-3)
    print("KERNEL_OK")
</pallas_src>

<mosaic_0001>
module attributes {stable_mosaic.version = 11 : i64} {
  func.func @graph_lstm_kernel(%arg0: i32, %arg1: memref<168x4xf32, #tpu.memory_space<vmem>>, %arg2: memref<12x168x32xf32, #tpu.memory_space<vmem>>, %arg3: memref<3x168x32xf32, #tpu.memory_space<vmem>>, %arg4: memref<16x168xf32, #tpu.memory_space<vmem>>, %arg5: memref<32x4xf32, #tpu.memory_space<vmem>>, %arg6: memref<1x4xf32, #tpu.memory_space<vmem>>, %arg7: memref<16x4xf32, #tpu.memory_space<vmem>>) attributes {dimension_semantics = [#tpu.dimension_semantics<arbitrary>], iteration_bounds = array<i64: 1>, scalar_prefetch = 0 : i64, scratch_operands = 0 : i64, tpu.core_type = #tpu.core_type<tc>, window_params = [{pipeline_mode = #tpu.pipeline_mode<synchronous>, transform_indices = @transform_0, window_bounds = array<i64: 168, 4>}, {pipeline_mode = #tpu.pipeline_mode<synchronous>, transform_indices = @transform_1, window_bounds = array<i64: 12, 168, 32>}, {pipeline_mode = #tpu.pipeline_mode<synchronous>, transform_indices = @transform_2, window_bounds = array<i64: 3, 168, 32>}, {pipeline_mode = #tpu.pipeline_mode<synchronous>, transform_indices = @transform_3, window_bounds = array<i64: 16, 168>}, {pipeline_mode = #tpu.pipeline_mode<synchronous>, transform_indices = @transform_4, window_bounds = array<i64: 32, 4>}, {pipeline_mode = #tpu.pipeline_mode<synchronous>, transform_indices = @transform_5, window_bounds = array<i64: 1, 4>}, {pipeline_mode = #tpu.pipeline_mode<synchronous>, transform_indices = @transform_6, window_bounds = array<i64: 16, 4>}]} {
    %c0 = arith.constant 0 : index
    %c0_0 = arith.constant 0 : index
    %0 = vector.load %arg1[%c0, %c0_0] : memref<168x4xf32, #tpu.memory_space<vmem>>, vector<168x4xf32>
    %1 = vector.extract_strided_slice %0 {offsets = [0, 0], sizes = [168, 1], strides = [1, 1]} : vector<168x4xf32> to vector<168x1xf32>
    %2 = vector.shape_cast %1 : vector<168x1xf32> to vector<168x1xf32>
    %3 = vector.broadcast %2 : vector<168x1xf32> to vector<168x32xf32>
    %4 = vector.extract_strided_slice %0 {offsets = [0, 1], sizes = [168, 1], strides = [1, 1]} : vector<168x4xf32> to vector<168x1xf32>
    %5 = vector.shape_cast %4 : vector<168x1xf32> to vector<168x1xf32>
    %6 = vector.broadcast %5 : vector<168x1xf32> to vector<168x32xf32>
    %7 = vector.extract_strided_slice %0 {offsets = [0, 2], sizes = [168, 1], strides = [1, 1]} : vector<168x4xf32> to vector<168x1xf32>
    %8 = vector.shape_cast %7 : vector<168x1xf32> to vector<168x1xf32>
    %9 = vector.broadcast %8 : vector<168x1xf32> to vector<168x32xf32>
    %10 = vector.extract_strided_slice %0 {offsets = [0, 3], sizes = [168, 1], strides = [1, 1]} : vector<168x4xf32> to vector<168x1xf32>
    %11 = vector.shape_cast %10 : vector<168x1xf32> to vector<168x1xf32>
    %12 = vector.broadcast %11 : vector<168x1xf32> to vector<168x32xf32>
    %c0_1 = arith.constant 0 : index
    %c0_2 = arith.constant 0 : index
    %c0_3 = arith.constant 0 : index
    %13 = vector.load %arg3[%c0_1, %c0_2, %c0_3] : memref<3x168x32xf32, #tpu.memory_space<vmem>>, vector<1x168x32xf32>
    %14 = vector.shape_cast %13 : vector<1x168x32xf32> to vector<168x32xf32>
    %c0_4 = arith.constant 0 : index
    %c0_5 = arith.constant 0 : index
    %c0_6 = arith.constant 0 : index
    %15 = vector.load %arg2[%c0_4, %c0_5, %c0_6] : memref<12x168x32xf32, #tpu.memory_space<vmem>>, vector<1x168x32xf32>
    %16 = vector.shape_cast %15 : vector<1x168x32xf32> to vector<168x32xf32>
    %17 = arith.mulf %3, %16 : vector<168x32xf32>
    %18 = arith.addf %14, %17 : vector<168x32xf32>
    %c1 = arith.constant 1 : index
    %c0_7 = arith.constant 0 : index
    %c0_8 = arith.constant 0 : index
    %19 = vector.load %arg2[%c1, %c0_7, %c0_8] : memref<12x168x32xf32, #tpu.memory_space<vmem>>, vector<1x168x32xf32>
    %20 = vector.shape_cast %19 : vector<1x168x32xf32> to vector<168x32xf32>
    %21 = arith.mulf %6, %20 : vector<168x32xf32>
    %22 = arith.addf %18, %21 : vector<168x32xf32>
    %c2 = arith.constant 2 : index
    %c0_9 = arith.constant 0 : index
    %c0_10 = arith.constant 0 : index
    %23 = vector.load %arg2[%c2, %c0_9, %c0_10] : memref<12x168x32xf32, #tpu.memory_space<vmem>>, vector<1x168x32xf32>
    %24 = vector.shape_cast %23 : vector<1x168x32xf32> to vector<168x32xf32>
    %25 = arith.mulf %9, %24 : vector<168x32xf32>
    %26 = arith.addf %22, %25 : vector<168x32xf32>
    %c3 = arith.constant 3 : index
    %c0_11 = arith.constant 0 : index
    %c0_12 = arith.constant 0 : index
    %27 = vector.load %arg2[%c3, %c0_11, %c0_12] : memref<12x168x32xf32, #tpu.memory_space<vmem>>, vector<1x168x32xf32>
    %28 = vector.shape_cast %27 : vector<1x168x32xf32> to vector<168x32xf32>
    %29 = arith.mulf %12, %28 : vector<168x32xf32>
    %30 = arith.addf %26, %29 : vector<168x32xf32>
    %31 = arith.negf %30 : vector<168x32xf32>
    %32 = math.exp %31 : vector<168x32xf32>
    %cst = arith.constant 1.000000e+00 : f32
    %33 = vector.broadcast %cst : f32 to vector<168x32xf32>
    %34 = arith.addf %33, %32 : vector<168x32xf32>
    %35 = arith.divf %33, %34 : vector<168x32xf32>
    %c1_13 = arith.constant 1 : index
    %c0_14 = arith.constant 0 : index
    %c0_15 = arith.constant 0 : index
    %36 = vector.load %arg3[%c1_13, %c0_14, %c0_15] : memref<3x168x32xf32, #tpu.memory_space<vmem>>, vector<1x168x32xf32>
    %37 = vector.shape_cast %36 : vector<1x168x32xf32> to vector<168x32xf32>
    %c4 = arith.constant 4 : index
    %c0_16 = arith.constant 0 : index
    %c0_17 = arith.constant 0 : index
    %38 = vector.load %arg2[%c4, %c0_16, %c0_17] : memref<12x168x32xf32, #tpu.memory_space<vmem>>, vector<1x168x32xf32>
    %39 = vector.shape_cast %38 : vector<1x168x32xf32> to vector<168x32xf32>
    %40 = arith.mulf %3, %39 : vector<168x32xf32>
    %41 = arith.addf %37, %40 : vector<168x32xf32>
    %c5 = arith.constant 5 : index
    %c0_18 = arith.constant 0 : index
    %c0_19 = arith.constant 0 : index
    %42 = vector.load %arg2[%c5, %c0_18, %c0_19] : memref<12x168x32xf32, #tpu.memory_space<vmem>>, vector<1x168x32xf32>
    %43 = vector.shape_cast %42 : vector<1x168x32xf32> to vector<168x32xf32>
    %44 = arith.mulf %6, %43 : vector<168x32xf32>
    %45 = arith.addf %41, %44 : vector<168x32xf32>
    %c6 = arith.constant 6 : index
    %c0_20 = arith.constant 0 : index
    %c0_21 = arith.constant 0 : index
    %46 = vector.load %arg2[%c6, %c0_20, %c0_21] : memref<12x168x32xf32, #tpu.memory_space<vmem>>, vector<1x168x32xf32>
    %47 = vector.shape_cast %46 : vector<1x168x32xf32> to vector<168x32xf32>
    %48 = arith.mulf %9, %47 : vector<168x32xf32>
    %49 = arith.addf %45, %48 : vector<168x32xf32>
    %c7 = arith.constant 7 : index
    %c0_22 = arith.constant 0 : index
    %c0_23 = arith.constant 0 : index
    %50 = vector.load %arg2[%c7, %c0_22, %c0_23] : memref<12x168x32xf32, #tpu.memory_space<vmem>>, vector<1x168x32xf32>
    %51 = vector.shape_cast %50 : vector<1x168x32xf32> to vector<168x32xf32>
    %52 = arith.mulf %12, %51 : vector<168x32xf32>
    %53 = arith.addf %49, %52 : vector<168x32xf32>
    %54 = math.tanh %53 : vector<168x32xf32>
    %c2_24 = arith.constant 2 : index
    %c0_25 = arith.constant 0 : index
    %c0_26 = arith.constant 0 : index
    %55 = vector.load %arg3[%c2_24, %c0_25, %c0_26] : memref<3x168x32xf32, #tpu.memory_space<vmem>>, vector<1x168x32xf32>
    %56 = vector.shape_cast %55 : vector<1x168x32xf32> to vector<168x32xf32>
    %c8 = arith.constant 8 : index
    %c0_27 = arith.constant 0 : index
    %c0_28 = arith.constant 0 : index
    %57 = vector.load %arg2[%c8, %c0_27, %c0_28] : memref<12x168x32xf32, #tpu.memory_space<vmem>>, vector<1x168x32xf32>
    %58 = vector.shape_cast %57 : vector<1x168x32xf32> to vector<168x32xf32>
    %59 = arith.mulf %3, %58 : vector<168x32xf32>
    %60 = arith.addf %56, %59 : vector<168x32xf32>
    %c9 = arith.constant 9 : index
    %c0_29 = arith.constant 0 : index
    %c0_30 = arith.constant 0 : index
    %61 = vector.load %arg2[%c9, %c0_29, %c0_30] : memref<12x168x32xf32, #tpu.memory_space<vmem>>, vector<1x168x32xf32>
    %62 = vector.shape_cast %61 : vector<1x168x32xf32> to vector<168x32xf32>
    %63 = arith.mulf %6, %62 : vector<168x32xf32>
    %64 = arith.addf %60, %63 : vector<168x32xf32>
    %c10 = arith.constant 10 : index
    %c0_31 = arith.constant 0 : index
    %c0_32 = arith.constant 0 : index
    %65 = vector.load %arg2[%c10, %c0_31, %c0_32] : memref<12x168x32xf32, #tpu.memory_space<vmem>>, vector<1x168x32xf32>
    %66 = vector.shape_cast %65 : vector<1x168x32xf32> to vector<168x32xf32>
    %67 = arith.mulf %9, %66 : vector<168x32xf32>
    %68 = arith.addf %64, %67 : vector<168x32xf32>
    %c11 = arith.constant 11 : index
    %c0_33 = arith.constant 0 : index
    %c0_34 = arith.constant 0 : index
    %69 = vector.load %arg2[%c11, %c0_33, %c0_34] : memref<12x168x32xf32, #tpu.memory_space<vmem>>, vector<1x168x32xf32>
    %70 = vector.shape_cast %69 : vector<1x168x32xf32> to vector<168x32xf32>
    %71 = arith.mulf %12, %70 : vector<168x32xf32>
    %72 = arith.addf %68, %71 : vector<168x32xf32>
    %73 = arith.negf %72 : vector<168x32xf32>
    %74 = math.exp %73 : vector<168x32xf32>
    %cst_35 = arith.constant 1.000000e+00 : f32
    %75 = vector.broadcast %cst_35 : f32 to vector<168x32xf32>
    %76 = arith.addf %75, %74 : vector<168x32xf32>
    %77 = arith.divf %75, %76 : vector<168x32xf32>
    %78 = arith.mulf %35, %54 : vector<168x32xf32>
    %79 = math.tanh %78 : vector<168x32xf32>
    %80 = arith.mulf %77, %79 : vector<168x32xf32>
    %c0_36 = arith.constant 0 : index
    %c0_37 = arith.constant 0 : index
    %81 = vector.load %arg4[%c0_36, %c0_37] : memref<16x168xf32, #tpu.memory_space<vmem>>, vector<16x168xf32>
    %cst_38 = arith.constant dense<0.000000e+00> : vector<16x32xf32>
    %82 = tpu.matmul %81, %80, %cst_38 {dimension_numbers = #tpu.dot_dimension_numbers<[1], [0], [0], [1], [0, 0, 1, 1], [], []>} : vector<16x168xf32>, vector<168x32xf32>, vector<16x32xf32> -> vector<16x32xf32>
    %c0_39 = arith.constant 0 : index
    %c0_40 = arith.constant 0 : index
    %83 = vector.load %arg5[%c0_39, %c0_40] : memref<32x4xf32, #tpu.memory_space<vmem>>, vector<32x4xf32>
    %cst_41 = arith.constant dense<0.000000e+00> : vector<16x4xf32>
    %84 = tpu.matmul %82, %83, %cst_41 {dimension_numbers = #tpu.dot_dimension_numbers<[1], [0], [0], [1], [0, 0, 1, 1], [], []>} : vector<16x32xf32>, vector<32x4xf32>, vector<16x4xf32> -> vector<16x4xf32>
    %c0_42 = arith.constant 0 : index
    %c0_43 = arith.constant 0 : index
    %85 = vector.load %arg6[%c0_42, %c0_43] : memref<1x4xf32, #tpu.memory_space<vmem>>, vector<1x4xf32>
    %86 = vector.broadcast %85 : vector<1x4xf32> to vector<16x4xf32>
    %87 = arith.addf %84, %86 : vector<16x4xf32>
    %c0_44 = arith.constant 0 : index
    %c0_45 = arith.constant 0 : index
    %88 = vector.load %arg7[%c0_44, %c0_45] : memref<16x4xf32, #tpu.memory_space<vmem>>, vector<16x4xf32>
    tpu.vector_store %arg7[%c0_44, %c0_45], %87 {strides = array<i32>} : memref<16x4xf32, #tpu.memory_space<vmem>>, vector<16x4xf32>,
    return
  }
  func.func @transform_0(%arg0: i32) -> (i32, i32) {
    %c0_i32 = arith.constant 0 : i32
    %c0_i32_0 = arith.constant 0 : i32
    %c0_i32_1 = arith.constant 0 : i32
    return %c0_i32, %c0_i32_0 : i32, i32
  }
  func.func @transform_1(%arg0: i32) -> (i32, i32, i32) {
    %c0_i32 = arith.constant 0 : i32
    %c0_i32_0 = arith.constant 0 : i32
    %c0_i32_1 = arith.constant 0 : i32
    %c0_i32_2 = arith.constant 0 : i32
    return %c0_i32, %c0_i32_0, %c0_i32_1 : i32, i32, i32
  }
  func.func @transform_2(%arg0: i32) -> (i32, i32, i32) {
    %c0_i32 = arith.constant 0 : i32
    %c0_i32_0 = arith.constant 0 : i32
    %c0_i32_1 = arith.constant 0 : i32
    %c0_i32_2 = arith.constant 0 : i32
    return %c0_i32, %c0_i32_0, %c0_i32_1 : i32, i32, i32
  }
  func.func @transform_3(%arg0: i32) -> (i32, i32) {
    %c0_i32 = arith.constant 0 : i32
    %c0_i32_0 = arith.constant 0 : i32
    %c0_i32_1 = arith.constant 0 : i32
    return %c0_i32, %c0_i32_0 : i32, i32
  }
  func.func @transform_4(%arg0: i32) -> (i32, i32) {
    %c0_i32 = arith.constant 0 : i32
    %c0_i32_0 = arith.constant 0 : i32
    %c0_i32_1 = arith.constant 0 : i32
    return %c0_i32, %c0_i32_0 : i32, i32
  }
  func.func @transform_5(%arg0: i32) -> (i32, i32) {
    %c0_i32 = arith.constant 0 : i32
    %c0_i32_0 = arith.constant 0 : i32
    %c0_i32_1 = arith.constant 0 : i32
    return %c0_i32, %c0_i32_0 : i32, i32
  }
  func.func @transform_6(%arg0: i32) -> (i32, i32) {
    %c0_i32 = arith.constant 0 : i32
    %c0_i32_0 = arith.constant 0 : i32
    %c0_i32_1 = arith.constant 0 : i32
    return %c0_i32, %c0_i32_0 : i32, i32
  }
}

</mosaic_0001>

<llo_original>
// kernel: tpu_custom_call.1
$region0: #{tpu_custom_call.1}
  #allocation0 [shape = 'u32[]', space=smem, size = 0x4, offset = 0x4, fixed_abs, tag = 'smem constant byte address 0x4 - core index']
  #allocation1 [shape = 'u32[144,128]{1,0:T(1,128)}', space=vmem, size = 0x12000, scoped, tag = 'internal scratch']
  %s0 = inlined_call_operand.vmem [shape: f32[168,4], index: 0, kind: input, shape index: {}]
  %s1 = inlined_call_operand.vmem [shape: f32[12,168,32], index: 1, kind: input, shape index: {}]
  %s2 = inlined_call_operand.vmem [shape: f32[3,168,32], index: 2, kind: input, shape index: {}]
  %s3 = inlined_call_operand.vmem [shape: f32[16,168], index: 3, kind: input, shape index: {}]
  %s4 = inlined_call_operand.vmem [shape: f32[32,4], index: 4, kind: input, shape index: {}]
  %s5 = inlined_call_operand.vmem [shape: f32[1,4], index: 5, kind: input, shape index: {}]
  %s6 = inlined_call_operand.vmem [shape: f32[16,4], index: 6, kind: output, shape index: {}]
  %s7 = sld [smem:[#allocation0]]
  $region34: #{tpu_custom_call.1} parent=0
    _
  %s9 = ssub.s32 1, %s7
  %s10 = scalar_select 0, %s9, %s7
  // Predicated region
  $region2: #{tpu_custom_call.1} parent=0 // pred_check
    _
  $region3: #{tpu_custom_call.1} parent=0 // pred_check_branch
    %12 = sbr.rel (0) target = $region5
  $region4: #{tpu_custom_call.1} parent=0 // pred_region
    _
  $region5: #{tpu_custom_call.1} parent=0 // pred_fallthru
    _
  // Predicated region
  $region6: #{tpu_custom_call.1} parent=0 // pred_check
    _
  $region7: #{tpu_custom_call.1} parent=0 // pred_check_branch
    %14 = sbr.rel (0) target = $region9
  $region8: #{tpu_custom_call.1} parent=0 // pred_region
    _
  $region9: #{tpu_custom_call.1} parent=0 // pred_fallthru
    _
  // Predicated region
  $region10: #{tpu_custom_call.1} parent=0 // pred_check
    _
  $region11: #{tpu_custom_call.1} parent=0 // pred_check_branch
    %16 = sbr.rel (0) target = $region13
  $region12: #{tpu_custom_call.1} parent=0 // pred_region
    _
  $region13: #{tpu_custom_call.1} parent=0 // pred_fallthru
    _
  // Predicated region
  $region14: #{tpu_custom_call.1} parent=0 // pred_check
    _
  $region15: #{tpu_custom_call.1} parent=0 // pred_check_branch
    %18 = sbr.rel (0) target = $region17
  $region16: #{tpu_custom_call.1} parent=0 // pred_region
    _
  $region17: #{tpu_custom_call.1} parent=0 // pred_fallthru
    _
  // Predicated region
  $region18: #{tpu_custom_call.1} parent=0 // pred_check
    _
  $region19: #{tpu_custom_call.1} parent=0 // pred_check_branch
    %20 = sbr.rel (0) target = $region21
  $region20: #{tpu_custom_call.1} parent=0 // pred_region
    _
  $region21: #{tpu_custom_call.1} parent=0 // pred_fallthru
    _
  // Predicated region
  $region22: #{tpu_custom_call.1} parent=0 // pred_check
    _
  $region23: #{tpu_custom_call.1} parent=0 // pred_check_branch
    %22 = sbr.rel (0) target = $region25
  $region24: #{tpu_custom_call.1} parent=0 // pred_region
    _
  $region25: #{tpu_custom_call.1} parent=0 // pred_fallthru
    _
  %v23 = vld [vmem:[%s0] sm:$0xff]
  %v24 = vld [vmem:[%s0 + $0x8] sm:$0xff]
  %v25 = vld [vmem:[%s0 + $0x10] sm:$0xff]
  %v26 = vld [vmem:[%s0 + $0x18] sm:$0xff]
  %v27 = vld [vmem:[%s0 + $0x20] sm:$0xff]
  %v28 = vld [vmem:[%s0 + $0x28] sm:$0xff]
  %v29 = vld [vmem:[%s0 + $0x30] sm:$0xff]
  %v30 = vld [vmem:[%s0 + $0x38] sm:$0xff]
  %v31 = vld [vmem:[%s0 + $0x40] sm:$0xff]
  %v32 = vld [vmem:[%s0 + $0x48] sm:$0xff]
  %v33 = vld [vmem:[%s0 + $0x50] sm:$0xff]
  %v34 = vld [vmem:[%s0 + $0x58] sm:$0xff]
  %v35 = vld [vmem:[%s0 + $0x60] sm:$0xff]
  %v36 = vld [vmem:[%s0 + $0x68] sm:$0xff]
  %v37 = vld [vmem:[%s0 + $0x70] sm:$0xff]
  %v38 = vld [vmem:[%s0 + $0x78] sm:$0xff]
  %v39 = vld [vmem:[%s0 + $0x80] sm:$0xff]
  %v40 = vld [vmem:[%s0 + $0x88] sm:$0xff]
  %v41 = vld [vmem:[%s0 + $0x90] sm:$0xff]
  %v42 = vld [vmem:[%s0 + $0x98] sm:$0xff]
  %v43 = vld [vmem:[%s0 + $0xa0] sm:$0xff]
  %45 = vset.pattern.permute.xlu0 0
  %46 = vperm.xlu0 %45, %v23
  %v47 = vpop.permute.xlu0 %46
  %50 = vset.pattern.permute.xlu0 0
  %51 = vperm.xlu0 %50, %v24
  %v52 = vpop.permute.xlu0 %51
  %55 = vset.pattern.permute.xlu0 0
  %56 = vperm.xlu0 %55, %v25
  %v57 = vpop.permute.xlu0 %56
  %60 = vset.pattern.permute.xlu0 0
  %61 = vperm.xlu0 %60, %v26
  %v62 = vpop.permute.xlu0 %61
  %65 = vset.pattern.permute.xlu0 0
  %66 = vperm.xlu0 %65, %v27
  %v67 = vpop.permute.xlu0 %66
  %70 = vset.pattern.permute.xlu0 0
  %71 = vperm.xlu0 %70, %v28
  %v72 = vpop.permute.xlu0 %71
  %75 = vset.pattern.permute.xlu0 0
  %76 = vperm.xlu0 %75, %v29
  %v77 = vpop.permute.xlu0 %76
  %80 = vset.pattern.permute.xlu0 0
  %81 = vperm.xlu0 %80, %v30
  %v82 = vpop.permute.xlu0 %81
  %85 = vset.pattern.permute.xlu0 0
  %86 = vperm.xlu0 %85, %v31
  %v87 = vpop.permute.xlu0 %86
  %90 = vset.pattern.permute.xlu0 0
  %91 = vperm.xlu0 %90, %v32
  %v92 = vpop.permute.xlu0 %91
  %95 = vset.pattern.permute.xlu0 0
  %96 = vperm.xlu0 %95, %v33
  %v97 = vpop.permute.xlu0 %96
  %100 = vset.pattern.permute.xlu0 0
  %101 = vperm.xlu0 %100, %v34
  %v102 = vpop.permute.xlu0 %101
  %105 = vset.pattern.permute.xlu0 0
  %106 = vperm.xlu0 %105, %v35
  %v107 = vpop.permute.xlu0 %106
  %110 = vset.pattern.permute.xlu0 0
  %111 = vperm.xlu0 %110, %v36
  %v112 = vpop.permute.xlu0 %111
  %115 = vset.pattern.permute.xlu0 0
  %116 = vperm.xlu0 %115, %v37
  %v117 = vpop.permute.xlu0 %116
  %120 = vset.pattern.permute.xlu0 0
  %121 = vperm.xlu0 %120, %v38
  %v122 = vpop.permute.xlu0 %121
  %125 = vset.pattern.permute.xlu0 0
  %126 = vperm.xlu0 %125, %v39
  %v127 = vpop.permute.xlu0 %126
  %130 = vset.pattern.permute.xlu0 0
  %131 = vperm.xlu0 %130, %v40
  %v132 = vpop.permute.xlu0 %131
  %135 = vset.pattern.permute.xlu0 0
  %136 = vperm.xlu0 %135, %v41
  %v137 = vpop.permute.xlu0 %136
  %140 = vset.pattern.permute.xlu0 0
  %141 = vperm.xlu0 %140, %v42
  %v142 = vpop.permute.xlu0 %141
  %145 = vset.pattern.permute.xlu0 0
  %146 = vperm.xlu0 %145, %v43
  %v147 = vpop.permute.xlu0 %146
  %149 = vset.pattern.permute.xlu0 1
  %150 = vperm.xlu0 %149, %v23
  %v151 = vpop.permute.xlu0 %150
  %153 = vset.pattern.permute.xlu0 1
  %154 = vperm.xlu0 %153, %v24
  %v155 = vpop.permute.xlu0 %154
  %157 = vset.pattern.permute.xlu0 1
  %158 = vperm.xlu0 %157, %v25
  %v159 = vpop.permute.xlu0 %158
  %161 = vset.pattern.permute.xlu0 1
  %162 = vperm.xlu0 %161, %v26
  %v163 = vpop.permute.xlu0 %162
  %165 = vset.pattern.permute.xlu0 1
  %166 = vperm.xlu0 %165, %v27
  %v167 = vpop.permute.xlu0 %166
  %169 = vset.pattern.permute.xlu0 1
  %170 = vperm.xlu0 %169, %v28
  %v171 = vpop.permute.xlu0 %170
  %173 = vset.pattern.permute.xlu0 1
  %174 = vperm.xlu0 %173, %v29
  %v175 = vpop.permute.xlu0 %174
  %177 = vset.pattern.permute.xlu0 1
  %178 = vperm.xlu0 %177, %v30
  %v179 = vpop.permute.xlu0 %178
  %181 = vset.pattern.permute.xlu0 1
  %182 = vperm.xlu0 %181, %v31
  %v183 = vpop.permute.xlu0 %182
  %185 = vset.pattern.permute.xlu0 1
  %186 = vperm.xlu0 %185, %v32
  %v187 = vpop.permute.xlu0 %186
  %189 = vset.pattern.permute.xlu0 1
  %190 = vperm.xlu0 %189, %v33
  %v191 = vpop.permute.xlu0 %190
  %193 = vset.pattern.permute.xlu0 1
  %194 = vperm.xlu0 %193, %v34
  %v195 = vpop.permute.xlu0 %194
  %197 = vset.pattern.permute.xlu0 1
  %198 = vperm.xlu0 %197, %v35
  %v199 = vpop.permute.xlu0 %198
  %201 = vset.pattern.permute.xlu0 1
  %202 = vperm.xlu0 %201, %v36
  %v203 = vpop.permute.xlu0 %202
  %205 = vset.pattern.permute.xlu0 1
  %206 = vperm.xlu0 %205, %v37
  %v207 = vpop.permute.xlu0 %206
  %209 = vset.pattern.permute.xlu0 1
  %210 = vperm.xlu0 %209, %v38
  %v211 = vpop.permute.xlu0 %210
  %213 = vset.pattern.permute.xlu0 1
  %214 = vperm.xlu0 %213, %v39
  %v215 = vpop.permute.xlu0 %214
  %217 = vset.pattern.permute.xlu0 1
  %218 = vperm.xlu0 %217, %v40
  %v219 = vpop.permute.xlu0 %218
  %221 = vset.pattern.permute.xlu0 1
  %222 = vperm.xlu0 %221, %v41
  %v223 = vpop.permute.xlu0 %222
  %225 = vset.pattern.permute.xlu0 1
  %226 = vperm.xlu0 %225, %v42
  %v227 = vpop.permute.xlu0 %226
  %229 = vset.pattern.permute.xlu0 1
  %230 = vperm.xlu0 %229, %v43
  %v231 = vpop.permute.xlu0 %230
  %233 = vset.pattern.permute.xlu0 2
  %234 = vperm.xlu0 %233, %v23
  %v235 = vpop.permute.xlu0 %234
  %237 = vset.pattern.permute.xlu0 2
  %238 = vperm.xlu0 %237, %v24
  %v239 = vpop.permute.xlu0 %238
  %241 = vset.pattern.permute.xlu0 2
  %242 = vperm.xlu0 %241, %v25
  %v243 = vpop.permute.xlu0 %242
  %245 = vset.pattern.permute.xlu0 2
  %246 = vperm.xlu0 %245, %v26
  %v247 = vpop.permute.xlu0 %246
  %249 = vset.pattern.permute.xlu0 2
  %250 = vperm.xlu0 %249, %v27
  %v251 = vpop.permute.xlu0 %250
  %253 = vset.pattern.permute.xlu0 2
  %254 = vperm.xlu0 %253, %v28
  %v255 = vpop.permute.xlu0 %254
  %257 = vset.pattern.permute.xlu0 2
  %258 = vperm.xlu0 %257, %v29
  %v259 = vpop.permute.xlu0 %258
  %261 = vset.pattern.permute.xlu0 2
  %262 = vperm.xlu0 %261, %v30
  %v263 = vpop.permute.xlu0 %262
  %265 = vset.pattern.permute.xlu0 2
  %266 = vperm.xlu0 %265, %v31
  %v267 = vpop.permute.xlu0 %266
  %269 = vset.pattern.permute.xlu0 2
  %270 = vperm.xlu0 %269, %v32
  %v271 = vpop.permute.xlu0 %270
  %273 = vset.pattern.permute.xlu0 2
  %274 = vperm.xlu0 %273, %v33
  %v275 = vpop.permute.xlu0 %274
  %277 = vset.pattern.permute.xlu0 2
  %278 = vperm.xlu0 %277, %v34
  %v279 = vpop.permute.xlu0 %278
  %281 = vset.pattern.permute.xlu0 2
  %282 = vperm.xlu0 %281, %v35
  %v283 = vpop.permute.xlu0 %282
  %285 = vset.pattern.permute.xlu0 2
  %286 = vperm.xlu0 %285, %v36
  %v287 = vpop.permute.xlu0 %286
  %289 = vset.pattern.permute.xlu0 2
  %290 = vperm.xlu0 %289, %v37
  %v291 = vpop.permute.xlu0 %290
  %293 = vset.pattern.permute.xlu0 2
  %294 = vperm.xlu0 %293, %v38
  %v295 = vpop.permute.xlu0 %294
  %297 = vset.pattern.permute.xlu0 2
  %298 = vperm.xlu0 %297, %v39
  %v299 = vpop.permute.xlu0 %298
  %301 = vset.pattern.permute.xlu0 2
  %302 = vperm.xlu0 %301, %v40
  %v303 = vpop.permute.xlu0 %302
  %305 = vset.pattern.permute.xlu0 2
  %306 = vperm.xlu0 %305, %v41
  %v307 = vpop.permute.xlu0 %306
  %309 = vset.pattern.permute.xlu0 2
  %310 = vperm.xlu0 %309, %v42
  %v311 = vpop.permute.xlu0 %310
  %313 = vset.pattern.permute.xlu0 2
  %314 = vperm.xlu0 %313, %v43
  %v315 = vpop.permute.xlu0 %314
  %317 = vset.pattern.permute.xlu0 3
  %318 = vperm.xlu0 %317, %v23
  %v319 = vpop.permute.xlu0 %318
  %321 = vset.pattern.permute.xlu0 3
  %322 = vperm.xlu0 %321, %v24
  %v323 = vpop.permute.xlu0 %322
  %325 = vset.pattern.permute.xlu0 3
  %326 = vperm.xlu0 %325, %v25
  %v327 = vpop.permute.xlu0 %326
  %329 = vset.pattern.permute.xlu0 3
  %330 = vperm.xlu0 %329, %v26
  %v331 = vpop.permute.xlu0 %330
  %333 = vset.pattern.permute.xlu0 3
  %334 = vperm.xlu0 %333, %v27
  %v335 = vpop.permute.xlu0 %334
  %337 = vset.pattern.permute.xlu0 3
  %338 = vperm.xlu0 %337, %v28
  %v339 = vpop.permute.xlu0 %338
  %341 = vset.pattern.permute.xlu0 3
  %342 = vperm.xlu0 %341, %v29
  %v343 = vpop.permute.xlu0 %342
  %345 = vset.pattern.permute.xlu0 3
  %346 = vperm.xlu0 %345, %v30
  %v347 = vpop.permute.xlu0 %346
  %349 = vset.pattern.permute.xlu0 3
  %350 = vperm.xlu0 %349, %v31
  %v351 = vpop.permute.xlu0 %350
  %353 = vset.pattern.permute.xlu0 3
  %354 = vperm.xlu0 %353, %v32
  %v355 = vpop.permute.xlu0 %354
  %357 = vset.pattern.permute.xlu0 3
  %358 = vperm.xlu0 %357, %v33
  %v359 = vpop.permute.xlu0 %358
  %361 = vset.pattern.permute.xlu0 3
  %362 = vperm.xlu0 %361, %v34
  %v363 = vpop.permute.xlu0 %362
  %365 = vset.pattern.permute.xlu0 3
  %366 = vperm.xlu0 %365, %v35
  %v367 = vpop.permute.xlu0 %366
  %369 = vset.pattern.permute.xlu0 3
  %370 = vperm.xlu0 %369, %v36
  %v371 = vpop.permute.xlu0 %370
  %373 = vset.pattern.permute.xlu0 3
  %374 = vperm.xlu0 %373, %v37
  %v375 = vpop.permute.xlu0 %374
  %377 = vset.pattern.permute.xlu0 3
  %378 = vperm.xlu0 %377, %v38
  %v379 = vpop.permute.xlu0 %378
  %381 = vset.pattern.permute.xlu0 3
  %382 = vperm.xlu0 %381, %v39
  %v383 = vpop.permute.xlu0 %382
  %385 = vset.pattern.permute.xlu0 3
  %386 = vperm.xlu0 %385, %v40
  %v387 = vpop.permute.xlu0 %386
  %389 = vset.pattern.permute.xlu0 3
  %390 = vperm.xlu0 %389, %v41
  %v391 = vpop.permute.xlu0 %390
  %393 = vset.pattern.permute.xlu0 3
  %394 = vperm.xlu0 %393, %v42
  %v395 = vpop.permute.xlu0 %394
  %397 = vset.pattern.permute.xlu0 3
  %398 = vperm.xlu0 %397, %v43
  %v399 = vpop.permute.xlu0 %398
  %v401 = vld [vmem:[%s2] sm:$0xff]
  %v402 = vld [vmem:[%s2 + $0x8] sm:$0xff]
  %v403 = vld [vmem:[%s2 + $0x10] sm:$0xff]
  %v404 = vld [vmem:[%s2 + $0x18] sm:$0xff]
  %v405 = vld [vmem:[%s2 + $0x20] sm:$0xff]
  %v406 = vld [vmem:[%s2 + $0x28] sm:$0xff]
  %v407 = vld [vmem:[%s2 + $0x30] sm:$0xff]
  %v408 = vld [vmem:[%s2 + $0x38] sm:$0xff]
  %v409 = vld [vmem:[%s2 + $0x40] sm:$0xff]
  %v410 = vld [vmem:[%s2 + $0x48] sm:$0xff]
  %v411 = vld [vmem:[%s2 + $0x50] sm:$0xff]
  %v412 = vld [vmem:[%s2 + $0x58] sm:$0xff]
  %v413 = vld [vmem:[%s2 + $0x60] sm:$0xff]
  %v414 = vld [vmem:[%s2 + $0x68] sm:$0xff]
  %v415 = vld [vmem:[%s2 + $0x70] sm:$0xff]
  %v416 = vld [vmem:[%s2 + $0x78] sm:$0xff]
  %v417 = vld [vmem:[%s2 + $0x80] sm:$0xff]
  %v418 = vld [vmem:[%s2 + $0x88] sm:$0xff]
  %v419 = vld [vmem:[%s2 + $0x90] sm:$0xff]
  %v420 = vld [vmem:[%s2 + $0x98] sm:$0xff]
  %v421 = vld [vmem:[%s2 + $0xa0] sm:$0xff]
  %v422 = vld [vmem:[%s1] sm:$0xff]
  %v423 = vld [vmem:[%s1 + $0x8] sm:$0xff]
  %v424 = vld [vmem:[%s1 + $0x10] sm:$0xff]
  %v425 = vld [vmem:[%s1 + $0x18] sm:$0xff]
  %v426 = vld [vmem:[%s1 + $0x20] sm:$0xff]
  %v427 = vld [vmem:[%s1 + $0x28] sm:$0xff]
  %v428 = vld [vmem:[%s1 + $0x30] sm:$0xff]
  %v429 = vld [vmem:[%s1 + $0x38] sm:$0xff]
  %v430 = vld [vmem:[%s1 + $0x40] sm:$0xff]
  %v431 = vld [vmem:[%s1 + $0x48] sm:$0xff]
  %v432 = vld [vmem:[%s1 + $0x50] sm:$0xff]
  %v433 = vld [vmem:[%s1 + $0x58] sm:$0xff]
  %v434 = vld [vmem:[%s1 + $0x60] sm:$0xff]
  %v435 = vld [vmem:[%s1 + $0x68] sm:$0xff]
  %v436 = vld [vmem:[%s1 + $0x70] sm:$0xff]
  %v437 = vld [vmem:[%s1 + $0x78] sm:$0xff]
  %v438 = vld [vmem:[%s1 + $0x80] sm:$0xff]
  %v439 = vld [vmem:[%s1 + $0x88] sm:$0xff]
  %v440 = vld [vmem:[%s1 + $0x90] sm:$0xff]
  %v441 = vld [vmem:[%s1 + $0x98] sm:$0xff]
  %v442 = vld [vmem:[%s1 + $0xa0] sm:$0xff]
  %v443 = vmul.f32 %v47, %v422
  %v444 = vmul.f32 %v52, %v423
  %v445 = vmul.f32 %v57, %v424
  %v446 = vmul.f32 %v62, %v425
  %v447 = vmul.f32 %v67, %v426
  %v448 = vmul.f32 %v72, %v427
  %v449 = vmul.f32 %v77, %v428
  %v450 = vmul.f32 %v82, %v429
  %v451 = vmul.f32 %v87, %v430
  %v452 = vmul.f32 %v92, %v431
  %v453 = vmul.f32 %v97, %v432
  %v454 = vmul.f32 %v102, %v433
  %v455 = vmul.f32 %v107, %v434
  %v456 = vmul.f32 %v112, %v435
  %v457 = vmul.f32 %v117, %v436
  %v458 = vmul.f32 %v122, %v437
  %v459 = vmul.f32 %v127, %v438
  %v460 = vmul.f32 %v132, %v439
  %v461 = vmul.f32 %v137, %v440
  %v462 = vmul.f32 %v142, %v441
  %v463 = vmul.f32 %v147, %v442
  %v464 = vadd.f32 %v401, %v443
  %v465 = vadd.f32 %v402, %v444
  %v466 = vadd.f32 %v403, %v445
  %v467 = vadd.f32 %v404, %v446
  %v468 = vadd.f32 %v405, %v447
  %v469 = vadd.f32 %v406, %v448
  %v470 = vadd.f32 %v407, %v449
  %v471 = vadd.f32 %v408, %v450
  %v472 = vadd.f32 %v409, %v451
  %v473 = vadd.f32 %v410, %v452
  %v474 = vadd.f32 %v411, %v453
  %v475 = vadd.f32 %v412, %v454
  %v476 = vadd.f32 %v413, %v455
  %v477 = vadd.f32 %v414, %v456
  %v478 = vadd.f32 %v415, %v457
  %v479 = vadd.f32 %v416, %v458
  %v480 = vadd.f32 %v417, %v459
  %v481 = vadd.f32 %v418, %v460
  %v482 = vadd.f32 %v419, %v461
  %v483 = vadd.f32 %v420, %v462
  %v484 = vadd.f32 %v421, %v463
  %s485 = scalar_lea.vmem %s1, 168
  %v486 = vld [vmem:[%s485] sm:$0xff]
  %v487 = vld [vmem:[%s485 + $0x8] sm:$0xff]
  %v488 = vld [vmem:[%s485 + $0x10] sm:$0xff]
  %v489 = vld [vmem:[%s485 + $0x18] sm:$0xff]
  %v490 = vld [vmem:[%s485 + $0x20] sm:$0xff]
  %v491 = vld [vmem:[%s485 + $0x28] sm:$0xff]
  %v492 = vld [vmem:[%s485 + $0x30] sm:$0xff]
  %v493 = vld [vmem:[%s485 + $0x38] sm:$0xff]
  %v494 = vld [vmem:[%s485 + $0x40] sm:$0xff]
  %v495 = vld [vmem:[%s485 + $0x48] sm:$0xff]
  %v496 = vld [vmem:[%s485 + $0x50] sm:$0xff]
  %v497 = vld [vmem:[%s485 + $0x58] sm:$0xff]
  %v498 = vld [vmem:[%s485 + $0x60] sm:$0xff]
  %v499 = vld [vmem:[%s485 + $0x68] sm:$0xff]
  %v500 = vld [vmem:[%s485 + $0x70] sm:$0xff]
  %v501 = vld [vmem:[%s485 + $0x78] sm:$0xff]
  %v502 = vld [vmem:[%s485 + $0x80] sm:$0xff]
  %v503 = vld [vmem:[%s485 + $0x88] sm:$0xff]
  %v504 = vld [vmem:[%s485 + $0x90] sm:$0xff]
  %v505 = vld [vmem:[%s485 + $0x98] sm:$0xff]
  %v506 = vld [vmem:[%s485 + $0xa0] sm:$0xff]
  %v507 = vmul.f32 %v151, %v486
  %v508 = vmul.f32 %v155, %v487
  %v509 = vmul.f32 %v159, %v488
  %v510 = vmul.f32 %v163, %v489
  %v511 = vmul.f32 %v167, %v490
  %v512 = vmul.f32 %v171, %v491
  %v513 = vmul.f32 %v175, %v492
  %v514 = vmul.f32 %v179, %v493
  %v515 = vmul.f32 %v183, %v494
  %v516 = vmul.f32 %v187, %v495
  %v517 = vmul.f32 %v191, %v496
  %v518 = vmul.f32 %v195, %v497
  %v519 = vmul.f32 %v199, %v498
  %v520 = vmul.f32 %v203, %v499
  %v521 = vmul.f32 %v207, %v500
  %v522 = vmul.f32 %v211, %v501
  %v523 = vmul.f32 %v215, %v502
  %v524 = vmul.f32 %v219, %v503
  %v525 = vmul.f32 %v223, %v504
  %v526 = vmul.f32 %v227, %v505
  %v527 = vmul.f32 %v231, %v506
  %v528 = vadd.f32 %v464, %v507
  %v529 = vadd.f32 %v465, %v508
  %v530 = vadd.f32 %v466, %v509
  %v531 = vadd.f32 %v467, %v510
  %v532 = vadd.f32 %v468, %v511
  %v533 = vadd.f32 %v469, %v512
  %v534 = vadd.f32 %v470, %v513
  %v535 = vadd.f32 %v471, %v514
  %v536 = vadd.f32 %v472, %v515
  %v537 = vadd.f32 %v473, %v516
  %v538 = vadd.f32 %v474, %v517
  %v539 = vadd.f32 %v475, %v518
  %v540 = vadd.f32 %v476, %v519
  %v541 = vadd.f32 %v477, %v520
  %v542 = vadd.f32 %v478, %v521
  %v543 = vadd.f32 %v479, %v522
  %v544 = vadd.f32 %v480, %v523
  %v545 = vadd.f32 %v481, %v524
  %v546 = vadd.f32 %v482, %v525
  %v547 = vadd.f32 %v483, %v526
  %v548 = vadd.f32 %v484, %v527
  %s549 = scalar_lea.vmem %s1, 336
  %v550 = vld [vmem:[%s549] sm:$0xff]
  %v551 = vld [vmem:[%s549 + $0x8] sm:$0xff]
  %v552 = vld [vmem:[%s549 + $0x10] sm:$0xff]
  %v553 = vld [vmem:[%s549 + $0x18] sm:$0xff]
  %v554 = vld [vmem:[%s549 + $0x20] sm:$0xff]
  %v555 = vld [vmem:[%s549 + $0x28] sm:$0xff]
  %v556 = vld [vmem:[%s549 + $0x30] sm:$0xff]
  %v557 = vld [vmem:[%s549 + $0x38] sm:$0xff]
  %v558 = vld [vmem:[%s549 + $0x40] sm:$0xff]
  %v559 = vld [vmem:[%s549 + $0x48] sm:$0xff]
  %v560 = vld [vmem:[%s549 + $0x50] sm:$0xff]
  %v561 = vld [vmem:[%s549 + $0x58] sm:$0xff]
  %v562 = vld [vmem:[%s549 + $0x60] sm:$0xff]
  %v563 = vld [vmem:[%s549 + $0x68] sm:$0xff]
  %v564 = vld [vmem:[%s549 + $0x70] sm:$0xff]
  %v565 = vld [vmem:[%s549 + $0x78] sm:$0xff]
  %v566 = vld [vmem:[%s549 + $0x80] sm:$0xff]
  %v567 = vld [vmem:[%s549 + $0x88] sm:$0xff]
  %v568 = vld [vmem:[%s549 + $0x90] sm:$0xff]
  %v569 = vld [vmem:[%s549 + $0x98] sm:$0xff]
  %v570 = vld [vmem:[%s549 + $0xa0] sm:$0xff]
  %v571 = vmul.f32 %v235, %v550
  %v572 = vmul.f32 %v239, %v551
  %v573 = vmul.f32 %v243, %v552
  %v574 = vmul.f32 %v247, %v553
  %v575 = vmul.f32 %v251, %v554
  %v576 = vmul.f32 %v255, %v555
  %v577 = vmul.f32 %v259, %v556
  %v578 = vmul.f32 %v263, %v557
  %v579 = vmul.f32 %v267, %v558
  %v580 = vmul.f32 %v271, %v559
  %v581 = vmul.f32 %v275, %v560
  %v582 = vmul.f32 %v279, %v561
  %v583 = vmul.f32 %v283, %v562
  %v584 = vmul.f32 %v287, %v563
  %v585 = vmul.f32 %v291, %v564
  %v586 = vmul.f32 %v295, %v565
  %v587 = vmul.f32 %v299, %v566
  %v588 = vmul.f32 %v303, %v567
  %v589 = vmul.f32 %v307, %v568
  %v590 = vmul.f32 %v311, %v569
  %v591 = vmul.f32 %v315, %v570
  %v592 = vadd.f32 %v528, %v571
  %v593 = vadd.f32 %v529, %v572
  %v594 = vadd.f32 %v530, %v573
  %v595 = vadd.f32 %v531, %v574
  %v596 = vadd.f32 %v532, %v575
  %v597 = vadd.f32 %v533, %v576
  %v598 = vadd.f32 %v534, %v577
  %v599 = vadd.f32 %v535, %v578
  %v600 = vadd.f32 %v536, %v579
  %v601 = vadd.f32 %v537, %v580
  %v602 = vadd.f32 %v538, %v581
  %v603 = vadd.f32 %v539, %v582
  %v604 = vadd.f32 %v540, %v583
  %v605 = vadd.f32 %v541, %v584
  %v606 = vadd.f32 %v542, %v585
  %v607 = vadd.f32 %v543, %v586
  %v608 = vadd.f32 %v544, %v587
  %v609 = vadd.f32 %v545, %v588
  %v610 = vadd.f32 %v546, %v589
  %v611 = vadd.f32 %v547, %v590
  %v612 = vadd.f32 %v548, %v591
  %s613 = scalar_lea.vmem %s1, 504
  %v614 = vld [vmem:[%s613] sm:$0xff]
  %v615 = vld [vmem:[%s613 + $0x8] sm:$0xff]
  %v616 = vld [vmem:[%s613 + $0x10] sm:$0xff]
  %v617 = vld [vmem:[%s613 + $0x18] sm:$0xff]
  %v618 = vld [vmem:[%s613 + $0x20] sm:$0xff]
  %v619 = vld [vmem:[%s613 + $0x28] sm:$0xff]
  %v620 = vld [vmem:[%s613 + $0x30] sm:$0xff]
  %v621 = vld [vmem:[%s613 + $0x38] sm:$0xff]
  %v622 = vld [vmem:[%s613 + $0x40] sm:$0xff]
  %v623 = vld [vmem:[%s613 + $0x48] sm:$0xff]
  %v624 = vld [vmem:[%s613 + $0x50] sm:$0xff]
  %v625 = vld [vmem:[%s613 + $0x58] sm:$0xff]
  %v626 = vld [vmem:[%s613 + $0x60] sm:$0xff]
  %v627 = vld [vmem:[%s613 + $0x68] sm:$0xff]
  %v628 = vld [vmem:[%s613 + $0x70] sm:$0xff]
  %v629 = vld [vmem:[%s613 + $0x78] sm:$0xff]
  %v630 = vld [vmem:[%s613 + $0x80] sm:$0xff]
  %v631 = vld [vmem:[%s613 + $0x88] sm:$0xff]
  %v632 = vld [vmem:[%s613 + $0x90] sm:$0xff]
  %v633 = vld [vmem:[%s613 + $0x98] sm:$0xff]
  %v634 = vld [vmem:[%s613 + $0xa0] sm:$0xff]
  %v635 = vmul.f32 %v319, %v614
  %v636 = vmul.f32 %v323, %v615
  %v637 = vmul.f32 %v327, %v616
  %v638 = vmul.f32 %v331, %v617
  %v639 = vmul.f32 %v335, %v618
  %v640 = vmul.f32 %v339, %v619
  %v641 = vmul.f32 %v343, %v620
  %v642 = vmul.f32 %v347, %v621
  %v643 = vmul.f32 %v351, %v622
  %v644 = vmul.f32 %v355, %v623
  %v645 = vmul.f32 %v359, %v624
  %v646 = vmul.f32 %v363, %v625
  %v647 = vmul.f32 %v367, %v626
  %v648 = vmul.f32 %v371, %v627
  %v649 = vmul.f32 %v375, %v628
  %v650 = vmul.f32 %v379, %v629
  %v651 = vmul.f32 %v383, %v630
  %v652 = vmul.f32 %v387, %v631
  %v653 = vmul.f32 %v391, %v632
  %v654 = vmul.f32 %v395, %v633
  %v655 = vmul.f32 %v399, %v634
  %v656 = vadd.f32 %v592, %v635
  %v657 = vadd.f32 %v593, %v636
  %v658 = vadd.f32 %v594, %v637
  %v659 = vadd.f32 %v595, %v638
  %v660 = vadd.f32 %v596, %v639
  %v661 = vadd.f32 %v597, %v640
  %v662 = vadd.f32 %v598, %v641
  %v663 = vadd.f32 %v599, %v642
  %v664 = vadd.f32 %v600, %v643
  %v665 = vadd.f32 %v601, %v644
  %v666 = vadd.f32 %v602, %v645
  %v667 = vadd.f32 %v603, %v646
  %v668 = vadd.f32 %v604, %v647
  %v669 = vadd.f32 %v605, %v648
  %v670 = vadd.f32 %v606, %v649
  %v671 = vadd.f32 %v607, %v650
  %v672 = vadd.f32 %v608, %v651
  %v673 = vadd.f32 %v609, %v652
  %v674 = vadd.f32 %v610, %v653
  %v675 = vadd.f32 %v611, %v654
  %v676 = vadd.f32 %v612, %v655
  %v677 = vxor.u32 %v656, 2147483648
  %v678 = vxor.u32 %v657, 2147483648
  %v679 = vxor.u32 %v658, 2147483648
  %v680 = vxor.u32 %v659, 2147483648
  %v681 = vxor.u32 %v660, 2147483648
  %v682 = vxor.u32 %v661, 2147483648
  %v683 = vxor.u32 %v662, 2147483648
  %v684 = vxor.u32 %v663, 2147483648
  %v685 = vxor.u32 %v664, 2147483648
  %v686 = vxor.u32 %v665, 2147483648
  %v687 = vxor.u32 %v666, 2147483648
  %v688 = vxor.u32 %v667, 2147483648
  %v689 = vxor.u32 %v668, 2147483648
  %v690 = vxor.u32 %v669, 2147483648
  %v691 = vxor.u32 %v670, 2147483648
  %v692 = vxor.u32 %v671, 2147483648
  %v693 = vxor.u32 %v672, 2147483648
  %v694 = vxor.u32 %v673, 2147483648
  %v695 = vxor.u32 %v674, 2147483648
  %v696 = vxor.u32 %v675, 2147483648
  %v697 = vxor.u32 %v676, 2147483648
  %v698 = vmul.f32 %v677, 1.442695
  %v699 = vpow.pop %v698
  %v700 = vmul.f32 %v678, 1.442695
  %v701 = vpow.pop %v700
  %v702 = vmul.f32 %v679, 1.442695
  %v703 = vpow.pop %v702
  %v704 = vmul.f32 %v680, 1.442695
  %v705 = vpow.pop %v704
  %v706 = vmul.f32 %v681, 1.442695
  %v707 = vpow.pop %v706
  %v708 = vmul.f32 %v682, 1.442695
  %v709 = vpow.pop %v708
  %v710 = vmul.f32 %v683, 1.442695
  %v711 = vpow.pop %v710
  %v712 = vmul.f32 %v684, 1.442695
  %v713 = vpow.pop %v712
  %v714 = vmul.f32 %v685, 1.442695
  %v715 = vpow.pop %v714
  %v716 = vmul.f32 %v686, 1.442695
  %v717 = vpow.pop %v716
  %v718 = vmul.f32 %v687, 1.442695
  %v719 = vpow.pop %v718
  %v720 = vmul.f32 %v688, 1.442695
  %v721 = vpow.pop %v720
  %v722 = vmul.f32 %v689, 1.442695
  %v723 = vpow.pop %v722
  %v724 = vmul.f32 %v690, 1.442695
  %v725 = vpow.pop %v724
  %v726 = vmul.f32 %v691, 1.442695
  %v727 = vpow.pop %v726
  %v728 = vmul.f32 %v692, 1.442695
  %v729 = vpow.pop %v728
  %v730 = vmul.f32 %v693, 1.442695
  %v731 = vpow.pop %v730
  %v732 = vmul.f32 %v694, 1.442695
  %v733 = vpow.pop %v732
  %v734 = vmul.f32 %v695, 1.442695
  %v735 = vpow.pop %v734
  %v736 = vmul.f32 %v696, 1.442695
  %v737 = vpow.pop %v736
  %v738 = vmul.f32 %v697, 1.442695
  %v739 = vpow.pop %v738
  %v740 = vadd.f32 %v699, 1.0
  %v741 = vadd.f32 %v701, 1.0
  %v742 = vadd.f32 %v703, 1.0
  %v743 = vadd.f32 %v705, 1.0
  %v744 = vadd.f32 %v707, 1.0
  %v745 = vadd.f32 %v709, 1.0
  %v746 = vadd.f32 %v711, 1.0
  %v747 = vadd.f32 %v713, 1.0
  %v748 = vadd.f32 %v715, 1.0
  %v749 = vadd.f32 %v717, 1.0
  %v750 = vadd.f32 %v719, 1.0
  %v751 = vadd.f32 %v721, 1.0
  %v752 = vadd.f32 %v723, 1.0
  %v753 = vadd.f32 %v725, 1.0
  %v754 = vadd.f32 %v727, 1.0
  %v755 = vadd.f32 %v729, 1.0
  %v756 = vadd.f32 %v731, 1.0
  %v757 = vadd.f32 %v733, 1.0
  %v758 = vadd.f32 %v735, 1.0
  %v759 = vadd.f32 %v737, 1.0
  %v760 = vadd.f32 %v739, 1.0
  %v761 = vrcp.pop %v740
  %v762 = vmul.f32 1.0, %v761
  %v763 = vrcp.pop %v741
  %v764 = vmul.f32 1.0, %v763
  %v765 = vrcp.pop %v742
  %v766 = vmul.f32 1.0, %v765
  %v767 = vrcp.pop %v743
  %v768 = vmul.f32 1.0, %v767
  %v769 = vrcp.pop %v744
  %v770 = vmul.f32 1.0, %v769
  %v771 = vrcp.pop %v745
  %v772 = vmul.f32 1.0, %v771
  %v773 = vrcp.pop %v746
  %v774 = vmul.f32 1.0, %v773
  %v775 = vrcp.pop %v747
  %v776 = vmul.f32 1.0, %v775
  %v777 = vrcp.pop %v748
  %v778 = vmul.f32 1.0, %v777
  %v779 = vrcp.pop %v749
  %v780 = vmul.f32 1.0, %v779
  %v781 = vrcp.pop %v750
  %v782 = vmul.f32 1.0, %v781
  %v783 = vrcp.pop %v751
  %v784 = vmul.f32 1.0, %v783
  %v785 = vrcp.pop %v752
  %v786 = vmul.f32 1.0, %v785
  %v787 = vrcp.pop %v753
  %v788 = vmul.f32 1.0, %v787
  %v789 = vrcp.pop %v754
  %v790 = vmul.f32 1.0, %v789
  %v791 = vrcp.pop %v755
  %v792 = vmul.f32 1.0, %v791
  %v793 = vrcp.pop %v756
  %v794 = vmul.f32 1.0, %v793
  %v795 = vrcp.pop %v757
  %v796 = vmul.f32 1.0, %v795
  %v797 = vrcp.pop %v758
  %v798 = vmul.f32 1.0, %v797
  %v799 = vrcp.pop %v759
  %v800 = vmul.f32 1.0, %v799
  %v801 = vrcp.pop %v760
  %v802 = vmul.f32 1.0, %v801
  %s803 = scalar_lea.vmem %s2, 168
  %v804 = vld [vmem:[%s803] sm:$0xff]
  %v805 = vld [vmem:[%s803 + $0x8] sm:$0xff]
  %v806 = vld [vmem:[%s803 + $0x10] sm:$0xff]
  %v807 = vld [vmem:[%s803 + $0x18] sm:$0xff]
  %v808 = vld [vmem:[%s803 + $0x20] sm:$0xff]
  %v809 = vld [vmem:[%s803 + $0x28] sm:$0xff]
  %v810 = vld [vmem:[%s803 + $0x30] sm:$0xff]
  %v811 = vld [vmem:[%s803 + $0x38] sm:$0xff]
  %v812 = vld [vmem:[%s803 + $0x40] sm:$0xff]
  %v813 = vld [vmem:[%s803 + $0x48] sm:$0xff]
  %v814 = vld [vmem:[%s803 + $0x50] sm:$0xff]
  %v815 = vld [vmem:[%s803 + $0x58] sm:$0xff]
  %v816 = vld [vmem:[%s803 + $0x60] sm:$0xff]
  %v817 = vld [vmem:[%s803 + $0x68] sm:$0xff]
  %v818 = vld [vmem:[%s803 + $0x70] sm:$0xff]
  %v819 = vld [vmem:[%s803 + $0x78] sm:$0xff]
  %v820 = vld [vmem:[%s803 + $0x80] sm:$0xff]
  %v821 = vld [vmem:[%s803 + $0x88] sm:$0xff]
  %v822 = vld [vmem:[%s803 + $0x90] sm:$0xff]
  %v823 = vld [vmem:[%s803 + $0x98] sm:$0xff]
  %v824 = vld [vmem:[%s803 + $0xa0] sm:$0xff]
  %s825 = scalar_lea.vmem %s1, 672
  %v826 = vld [vmem:[%s825] sm:$0xff]
  %v827 = vld [vmem:[%s825 + $0x8] sm:$0xff]
  %v828 = vld [vmem:[%s825 + $0x10] sm:$0xff]
  %v829 = vld [vmem:[%s825 + $0x18] sm:$0xff]
  %v830 = vld [vmem:[%s825 + $0x20] sm:$0xff]
  %v831 = vld [vmem:[%s825 + $0x28] sm:$0xff]
  %v832 = vld [vmem:[%s825 + $0x30] sm:$0xff]
  %v833 = vld [vmem:[%s825 + $0x38] sm:$0xff]
  %v834 = vld [vmem:[%s825 + $0x40] sm:$0xff]
  %v835 = vld [vmem:[%s825 + $0x48] sm:$0xff]
  %v836 = vld [vmem:[%s825 + $0x50] sm:$0xff]
  %v837 = vld [vmem:[%s825 + $0x58] sm:$0xff]
  %v838 = vld [vmem:[%s825 + $0x60] sm:$0xff]
  %v839 = vld [vmem:[%s825 + $0x68] sm:$0xff]
  %v840 = vld [vmem:[%s825 + $0x70] sm:$0xff]
  %v841 = vld [vmem:[%s825 + $0x78] sm:$0xff]
  %v842 = vld [vmem:[%s825 + $0x80] sm:$0xff]
  %v843 = vld [vmem:[%s825 + $0x88] sm:$0xff]
  %v844 = vld [vmem:[%s825 + $0x90] sm:$0xff]
  %v845 = vld [vmem:[%s825 + $0x98] sm:$0xff]
  %v846 = vld [vmem:[%s825 + $0xa0] sm:$0xff]
  %v847 = vmul.f32 %v47, %v826
  %v848 = vmul.f32 %v52, %v827
  %v849 = vmul.f32 %v57, %v828
  %v850 = vmul.f32 %v62, %v829
  %v851 = vmul.f32 %v67, %v830
  %v852 = vmul.f32 %v72, %v831
  %v853 = vmul.f32 %v77, %v832
  %v854 = vmul.f32 %v82, %v833
  %v855 = vmul.f32 %v87, %v834
  %v856 = vmul.f32 %v92, %v835
  %v857 = vmul.f32 %v97, %v836
  %v858 = vmul.f32 %v102, %v837
  %v859 = vmul.f32 %v107, %v838
  %v860 = vmul.f32 %v112, %v839
  %v861 = vmul.f32 %v117, %v840
  %v862 = vmul.f32 %v122, %v841
  %v863 = vmul.f32 %v127, %v842
  %v864 = vmul.f32 %v132, %v843
  %v865 = vmul.f32 %v137, %v844
  %v866 = vmul.f32 %v142, %v845
  %v867 = vmul.f32 %v147, %v846
  %v868 = vadd.f32 %v804, %v847
  %v869 = vadd.f32 %v805, %v848
  %v870 = vadd.f32 %v806, %v849
  %v871 = vadd.f32 %v807, %v850
  %v872 = vadd.f32 %v808, %v851
  %v873 = vadd.f32 %v809, %v852
  %v874 = vadd.f32 %v810, %v853
  %v875 = vadd.f32 %v811, %v854
  %v876 = vadd.f32 %v812, %v855
  %v877 = vadd.f32 %v813, %v856
  %v878 = vadd.f32 %v814, %v857
  %v879 = vadd.f32 %v815, %v858
  %v880 = vadd.f32 %v816, %v859
  %v881 = vadd.f32 %v817, %v860
  %v882 = vadd.f32 %v818, %v861
  %v883 = vadd.f32 %v819, %v862
  %v884 = vadd.f32 %v820, %v863
  %v885 = vadd.f32 %v821, %v864
  %v886 = vadd.f32 %v822, %v865
  %v887 = vadd.f32 %v823, %v866
  %v888 = vadd.f32 %v824, %v867
  %s889 = scalar_lea.vmem %s1, 840
  %v890 = vld [vmem:[%s889] sm:$0xff]
  %v891 = vld [vmem:[%s889 + $0x8] sm:$0xff]
  %v892 = vld [vmem:[%s889 + $0x10] sm:$0xff]
  %v893 = vld [vmem:[%s889 + $0x18] sm:$0xff]
  %v894 = vld [vmem:[%s889 + $0x20] sm:$0xff]
  %v895 = vld [vmem:[%s889 + $0x28] sm:$0xff]
  %v896 = vld [vmem:[%s889 + $0x30] sm:$0xff]
  %v897 = vld [vmem:[%s889 + $0x38] sm:$0xff]
  %v898 = vld [vmem:[%s889 + $0x40] sm:$0xff]
  %v899 = vld [vmem:[%s889 + $0x48] sm:$0xff]
  %v900 = vld [vmem:[%s889 + $0x50] sm:$0xff]
  %v901 = vld [vmem:[%s889 + $0x58] sm:$0xff]
  %v902 = vld [vmem:[%s889 + $0x60] sm:$0xff]
  %v903 = vld [vmem:[%s889 + $0x68] sm:$0xff]
  %v904 = vld [vmem:[%s889 + $0x70] sm:$0xff]
  %v905 = vld [vmem:[%s889 + $0x78] sm:$0xff]
  %v906 = vld [vmem:[%s889 + $0x80] sm:$0xff]
  %v907 = vld [vmem:[%s889 + $0x88] sm:$0xff]
  %v908 = vld [vmem:[%s889 + $0x90] sm:$0xff]
  %v909 = vld [vmem:[%s889 + $0x98] sm:$0xff]
  %v910 = vld [vmem:[%s889 + $0xa0] sm:$0xff]
  %v911 = vmul.f32 %v151, %v890
  %v912 = vmul.f32 %v155, %v891
  %v913 = vmul.f32 %v159, %v892
  %v914 = vmul.f32 %v163, %v893
  %v915 = vmul.f32 %v167, %v894
  %v916 = vmul.f32 %v171, %v895
  %v917 = vmul.f32 %v175, %v896
  %v918 = vmul.f32 %v179, %v897
  %v919 = vmul.f32 %v183, %v898
  %v920 = vmul.f32 %v187, %v899
  %v921 = vmul.f32 %v191, %v900
  %v922 = vmul.f32 %v195, %v901
  %v923 = vmul.f32 %v199, %v902
  %v924 = vmul.f32 %v203, %v903
  %v925 = vmul.f32 %v207, %v904
  %v926 = vmul.f32 %v211, %v905
  %v927 = vmul.f32 %v215, %v906
  %v928 = vmul.f32 %v219, %v907
  %v929 = vmul.f32 %v223, %v908
  %v930 = vmul.f32 %v227, %v909
  %v931 = vmul.f32 %v231, %v910
  %v932 = vadd.f32 %v868, %v911
  %v933 = vadd.f32 %v869, %v912
  %v934 = vadd.f32 %v870, %v913
  %v935 = vadd.f32 %v871, %v914
  %v936 = vadd.f32 %v872, %v915
  %v937 = vadd.f32 %v873, %v916
  %v938 = vadd.f32 %v874, %v917
  %v939 = vadd.f32 %v875, %v918
  %v940 = vadd.f32 %v876, %v919
  %v941 = vadd.f32 %v877, %v920
  %v942 = vadd.f32 %v878, %v921
  %v943 = vadd.f32 %v879, %v922
  %v944 = vadd.f32 %v880, %v923
  %v945 = vadd.f32 %v881, %v924
  %v946 = vadd.f32 %v882, %v925
  %v947 = vadd.f32 %v883, %v926
  %v948 = vadd.f32 %v884, %v927
  %v949 = vadd.f32 %v885, %v928
  %v950 = vadd.f32 %v886, %v929
  %v951 = vadd.f32 %v887, %v930
  %v952 = vadd.f32 %v888, %v931
  %s953 = scalar_lea.vmem %s1, 1008
  %v954 = vld [vmem:[%s953] sm:$0xff]
  %v955 = vld [vmem:[%s953 + $0x8] sm:$0xff]
  %v956 = vld [vmem:[%s953 + $0x10] sm:$0xff]
  %v957 = vld [vmem:[%s953 + $0x18] sm:$0xff]
  %v958 = vld [vmem:[%s953 + $0x20] sm:$0xff]
  %v959 = vld [vmem:[%s953 + $0x28] sm:$0xff]
  %v960 = vld [vmem:[%s953 + $0x30] sm:$0xff]
  %v961 = vld [vmem:[%s953 + $0x38] sm:$0xff]
  %v962 = vld [vmem:[%s953 + $0x40] sm:$0xff]
  %v963 = vld [vmem:[%s953 + $0x48] sm:$0xff]
  %v964 = vld [vmem:[%s953 + $0x50] sm:$0xff]
  %v965 = vld [vmem:[%s953 + $0x58] sm:$0xff]
  %v966 = vld [vmem:[%s953 + $0x60] sm:$0xff]
  %v967 = vld [vmem:[%s953 + $0x68] sm:$0xff]
  %v968 = vld [vmem:[%s953 + $0x70] sm:$0xff]
  %v969 = vld [vmem:[%s953 + $0x78] sm:$0xff]
  %v970 = vld [vmem:[%s953 + $0x80] sm:$0xff]
  %v971 = vld [vmem:[%s953 + $0x88] sm:$0xff]
  %v972 = vld [vmem:[%s953 + $0x90] sm:$0xff]
  %v973 = vld [vmem:[%s953 + $0x98] sm:$0xff]
  %v974 = vld [vmem:[%s953 + $0xa0] sm:$0xff]
  %v975 = vmul.f32 %v235, %v954
  %v976 = vmul.f32 %v239, %v955
  %v977 = vmul.f32 %v243, %v956
  %v978 = vmul.f32 %v247, %v957
  %v979 = vmul.f32 %v251, %v958
  %v980 = vmul.f32 %v255, %v959
  %v981 = vmul.f32 %v259, %v960
  %v982 = vmul.f32 %v263, %v961
  %v983 = vmul.f32 %v267, %v962
  %v984 = vmul.f32 %v271, %v963
  %v985 = vmul.f32 %v275, %v964
  %v986 = vmul.f32 %v279, %v965
  %v987 = vmul.f32 %v283, %v966
  %v988 = vmul.f32 %v287, %v967
  %v989 = vmul.f32 %v291, %v968
  %v990 = vmul.f32 %v295, %v969
  %v991 = vmul.f32 %v299, %v970
  %v992 = vmul.f32 %v303, %v971
  %v993 = vmul.f32 %v307, %v972
  %v994 = vmul.f32 %v311, %v973
  %v995 = vmul.f32 %v315, %v974
  %v996 = vadd.f32 %v932, %v975
  %v997 = vadd.f32 %v933, %v976
  %v998 = vadd.f32 %v934, %v977
  %v999 = vadd.f32 %v935, %v978
  %v1000 = vadd.f32 %v936, %v979
  %v1001 = vadd.f32 %v937, %v980
  %v1002 = vadd.f32 %v938, %v981
  %v1003 = vadd.f32 %v939, %v982
  %v1004 = vadd.f32 %v940, %v983
  %v1005 = vadd.f32 %v941, %v984
  %v1006 = vadd.f32 %v942, %v985
  %v1007 = vadd.f32 %v943, %v986
  %v1008 = vadd.f32 %v944, %v987
  %v1009 = vadd.f32 %v945, %v988
  %v1010 = vadd.f32 %v946, %v989
  %v1011 = vadd.f32 %v947, %v990
  %v1012 = vadd.f32 %v948, %v991
  %v1013 = vadd.f32 %v949, %v992
  %v1014 = vadd.f32 %v950, %v993
  %v1015 = vadd.f32 %v951, %v994
  %v1016 = vadd.f32 %v952, %v995
  %s1017 = scalar_lea.vmem %s1, 1176
  %v1018 = vld [vmem:[%s1017] sm:$0xff]
  %v1019 = vld [vmem:[%s1017 + $0x8] sm:$0xff]
  %v1020 = vld [vmem:[%s1017 + $0x10] sm:$0xff]
  %v1021 = vld [vmem:[%s1017 + $0x18] sm:$0xff]
  %v1022 = vld [vmem:[%s1017 + $0x20] sm:$0xff]
  %v1023 = vld [vmem:[%s1017 + $0x28] sm:$0xff]
  %v1024 = vld [vmem:[%s1017 + $0x30] sm:$0xff]
  %v1025 = vld [vmem:[%s1017 + $0x38] sm:$0xff]
  %v1026 = vld [vmem:[%s1017 + $0x40] sm:$0xff]
  %v1027 = vld [vmem:[%s1017 + $0x48] sm:$0xff]
  %v1028 = vld [vmem:[%s1017 + $0x50] sm:$0xff]
  %v1029 = vld [vmem:[%s1017 + $0x58] sm:$0xff]
  %v1030 = vld [vmem:[%s1017 + $0x60] sm:$0xff]
  %v1031 = vld [vmem:[%s1017 + $0x68] sm:$0xff]
  %v1032 = vld [vmem:[%s1017 + $0x70] sm:$0xff]
  %v1033 = vld [vmem:[%s1017 + $0x78] sm:$0xff]
  %v1034 = vld [vmem:[%s1017 + $0x80] sm:$0xff]
  %v1035 = vld [vmem:[%s1017 + $0x88] sm:$0xff]
  %v1036 = vld [vmem:[%s1017 + $0x90] sm:$0xff]
  %v1037 = vld [vmem:[%s1017 + $0x98] sm:$0xff]
  %v1038 = vld [vmem:[%s1017 + $0xa0] sm:$0xff]
  %v1039 = vmul.f32 %v319, %v1018
  %v1040 = vmul.f32 %v323, %v1019
  %v1041 = vmul.f32 %v327, %v1020
  %v1042 = vmul.f32 %v331, %v1021
  %v1043 = vmul.f32 %v335, %v1022
  %v1044 = vmul.f32 %v339, %v1023
  %v1045 = vmul.f32 %v343, %v1024
  %v1046 = vmul.f32 %v347, %v1025
  %v1047 = vmul.f32 %v351, %v1026
  %v1048 = vmul.f32 %v355, %v1027
  %v1049 = vmul.f32 %v359, %v1028
  %v1050 = vmul.f32 %v363, %v1029
  %v1051 = vmul.f32 %v367, %v1030
  %v1052 = vmul.f32 %v371, %v1031
  %v1053 = vmul.f32 %v375, %v1032
  %v1054 = vmul.f32 %v379, %v1033
  %v1055 = vmul.f32 %v383, %v1034
  %v1056 = vmul.f32 %v387, %v1035
  %v1057 = vmul.f32 %v391, %v1036
  %v1058 = vmul.f32 %v395, %v1037
  %v1059 = vmul.f32 %v399, %v1038
  %v1060 = vadd.f32 %v996, %v1039
  %v1061 = vadd.f32 %v997, %v1040
  %v1062 = vadd.f32 %v998, %v1041
  %v1063 = vadd.f32 %v999, %v1042
  %v1064 = vadd.f32 %v1000, %v1043
  %v1065 = vadd.f32 %v1001, %v1044
  %v1066 = vadd.f32 %v1002, %v1045
  %v1067 = vadd.f32 %v1003, %v1046
  %v1068 = vadd.f32 %v1004, %v1047
  %v1069 = vadd.f32 %v1005, %v1048
  %v1070 = vadd.f32 %v1006, %v1049
  %v1071 = vadd.f32 %v1007, %v1050
  %v1072 = vadd.f32 %v1008, %v1051
  %v1073 = vadd.f32 %v1009, %v1052
  %v1074 = vadd.f32 %v1010, %v1053
  %v1075 = vadd.f32 %v1011, %v1054
  %v1076 = vadd.f32 %v1012, %v1055
  %v1077 = vadd.f32 %v1013, %v1056
  %v1078 = vadd.f32 %v1014, %v1057
  %v1079 = vadd.f32 %v1015, %v1058
  %v1080 = vadd.f32 %v1016, %v1059
  %v1081 = vtanh.pop %v1060
  %v1082 = vtanh.pop %v1061
  %v1083 = vtanh.pop %v1062
  %v1084 = vtanh.pop %v1063
  %v1085 = vtanh.pop %v1064
  %v1086 = vtanh.pop %v1065
  %v1087 = vtanh.pop %v1066
  %v1088 = vtanh.pop %v1067
  %v1089 = vtanh.pop %v1068
  %v1090 = vtanh.pop %v1069
  %v1091 = vtanh.pop %v1070
  %v1092 = vtanh.pop %v1071
  %v1093 = vtanh.pop %v1072
  %v1094 = vtanh.pop %v1073
  %v1095 = vtanh.pop %v1074
  %v1096 = vtanh.pop %v1075
  %v1097 = vtanh.pop %v1076
  %v1098 = vtanh.pop %v1077
  %v1099 = vtanh.pop %v1078
  %v1100 = vtanh.pop %v1079
  %v1101 = vtanh.pop %v1080
  %s1102 = scalar_lea.vmem %s2, 336
  %v1103 = vld [vmem:[%s1102] sm:$0xff]
  %v1104 = vld [vmem:[%s1102 + $0x8] sm:$0xff]
  %v1105 = vld [vmem:[%s1102 + $0x10] sm:$0xff]
  %v1106 = vld [vmem:[%s1102 + $0x18] sm:$0xff]
  %v1107 = vld [vmem:[%s1102 + $0x20] sm:$0xff]
  %v1108 = vld [vmem:[%s1102 + $0x28] sm:$0xff]
  %v1109 = vld [vmem:[%s1102 + $0x30] sm:$0xff]
  %v1110 = vld [vmem:[%s1102 + $0x38] sm:$0xff]
  %v1111 = vld [vmem:[%s1102 + $0x40] sm:$0xff]
  %v1112 = vld [vmem:[%s1102 + $0x48] sm:$0xff]
  %v1113 = vld [vmem:[%s1102 + $0x50] sm:$0xff]
  %v1114 = vld [vmem:[%s1102 + $0x58] sm:$0xff]
  %v1115 = vld [vmem:[%s1102 + $0x60] sm:$0xff]
  %v1116 = vld [vmem:[%s1102 + $0x68] sm:$0xff]
  %v1117 = vld [vmem:[%s1102 + $0x70] sm:$0xff]
  %v1118 = vld [vmem:[%s1102 + $0x78] sm:$0xff]
  %v1119 = vld [vmem:[%s1102 + $0x80] sm:$0xff]
  %v1120 = vld [vmem:[%s1102 + $0x88] sm:$0xff]
  %v1121 = vld [vmem:[%s1102 + $0x90] sm:$0xff]
  %v1122 = vld [vmem:[%s1102 + $0x98] sm:$0xff]
  %v1123 = vld [vmem:[%s1102 + $0xa0] sm:$0xff]
  %s1124 = scalar_lea.vmem %s1, 1344
  %v1125 = vld [vmem:[%s1124] sm:$0xff]
  %v1126 = vld [vmem:[%s1124 + $0x8] sm:$0xff]
  %v1127 = vld [vmem:[%s1124 + $0x10] sm:$0xff]
  %v1128 = vld [vmem:[%s1124 + $0x18] sm:$0xff]
  %v1129 = vld [vmem:[%s1124 + $0x20] sm:$0xff]
  %v1130 = vld [vmem:[%s1124 + $0x28] sm:$0xff]
  %v1131 = vld [vmem:[%s1124 + $0x30] sm:$0xff]
  %v1132 = vld [vmem:[%s1124 + $0x38] sm:$0xff]
  %v1133 = vld [vmem:[%s1124 + $0x40] sm:$0xff]
  %v1134 = vld [vmem:[%s1124 + $0x48] sm:$0xff]
  %v1135 = vld [vmem:[%s1124 + $0x50] sm:$0xff]
  %v1136 = vld [vmem:[%s1124 + $0x58] sm:$0xff]
  %v1137 = vld [vmem:[%s1124 + $0x60] sm:$0xff]
  %v1138 = vld [vmem:[%s1124 + $0x68] sm:$0xff]
  %v1139 = vld [vmem:[%s1124 + $0x70] sm:$0xff]
  %v1140 = vld [vmem:[%s1124 + $0x78] sm:$0xff]
  %v1141 = vld [vmem:[%s1124 + $0x80] sm:$0xff]
  %v1142 = vld [vmem:[%s1124 + $0x88] sm:$0xff]
  %v1143 = vld [vmem:[%s1124 + $0x90] sm:$0xff]
  %v1144 = vld [vmem:[%s1124 + $0x98] sm:$0xff]
  %v1145 = vld [vmem:[%s1124 + $0xa0] sm:$0xff]
  %v1146 = vmul.f32 %v47, %v1125
  %v1147 = vmul.f32 %v52, %v1126
  %v1148 = vmul.f32 %v57, %v1127
  %v1149 = vmul.f32 %v62, %v1128
  %v1150 = vmul.f32 %v67, %v1129
  %v1151 = vmul.f32 %v72, %v1130
  %v1152 = vmul.f32 %v77, %v1131
  %v1153 = vmul.f32 %v82, %v1132
  %v1154 = vmul.f32 %v87, %v1133
  %v1155 = vmul.f32 %v92, %v1134
  %v1156 = vmul.f32 %v97, %v1135
  %v1157 = vmul.f32 %v102, %v1136
  %v1158 = vmul.f32 %v107, %v1137
  %v1159 = vmul.f32 %v112, %v1138
  %v1160 = vmul.f32 %v117, %v1139
  %v1161 = vmul.f32 %v122, %v1140
  %v1162 = vmul.f32 %v127, %v1141
  %v1163 = vmul.f32 %v132, %v1142
  %v1164 = vmul.f32 %v137, %v1143
  %v1165 = vmul.f32 %v142, %v1144
  %v1166 = vmul.f32 %v147, %v1145
  %v1167 = vadd.f32 %v1103, %v1146
  %v1168 = vadd.f32 %v1104, %v1147
  %v1169 = vadd.f32 %v1105, %v1148
  %v1170 = vadd.f32 %v1106, %v1149
  %v1171 = vadd.f32 %v1107, %v1150
  %v1172 = vadd.f32 %v1108, %v1151
  %v1173 = vadd.f32 %v1109, %v1152
  %v1174 = vadd.f32 %v1110, %v1153
  %v1175 = vadd.f32 %v1111, %v1154
  %v1176 = vadd.f32 %v1112, %v1155
  %v1177 = vadd.f32 %v1113, %v1156
  %v1178 = vadd.f32 %v1114, %v1157
  %v1179 = vadd.f32 %v1115, %v1158
  %v1180 = vadd.f32 %v1116, %v1159
  %v1181 = vadd.f32 %v1117, %v1160
  %v1182 = vadd.f32 %v1118, %v1161
  %v1183 = vadd.f32 %v1119, %v1162
  %v1184 = vadd.f32 %v1120, %v1163
  %v1185 = vadd.f32 %v1121, %v1164
  %v1186 = vadd.f32 %v1122, %v1165
  %v1187 = vadd.f32 %v1123, %v1166
  %s1188 = scalar_lea.vmem %s1, 1512
  %v1189 = vld [vmem:[%s1188] sm:$0xff]
  %v1190 = vld [vmem:[%s1188 + $0x8] sm:$0xff]
  %v1191 = vld [vmem:[%s1188 + $0x10] sm:$0xff]
  %v1192 = vld [vmem:[%s1188 + $0x18] sm:$0xff]
  %v1193 = vld [vmem:[%s1188 + $0x20] sm:$0xff]
  %v1194 = vld [vmem:[%s1188 + $0x28] sm:$0xff]
  %v1195 = vld [vmem:[%s1188 + $0x30] sm:$0xff]
  %v1196 = vld [vmem:[%s1188 + $0x38] sm:$0xff]
  %v1197 = vld [vmem:[%s1188 + $0x40] sm:$0xff]
  %v1198 = vld [vmem:[%s1188 + $0x48] sm:$0xff]
  %v1199 = vld [vmem:[%s1188 + $0x50] sm:$0xff]
  %v1200 = vld [vmem:[%s1188 + $0x58] sm:$0xff]
  %v1201 = vld [vmem:[%s1188 + $0x60] sm:$0xff]
  %v1202 = vld [vmem:[%s1188 + $0x68] sm:$0xff]
  %v1203 = vld [vmem:[%s1188 + $0x70] sm:$0xff]
  %v1204 = vld [vmem:[%s1188 + $0x78] sm:$0xff]
  %v1205 = vld [vmem:[%s1188 + $0x80] sm:$0xff]
  %v1206 = vld [vmem:[%s1188 + $0x88] sm:$0xff]
  %v1207 = vld [vmem:[%s1188 + $0x90] sm:$0xff]
  %v1208 = vld [vmem:[%s1188 + $0x98] sm:$0xff]
  %v1209 = vld [vmem:[%s1188 + $0xa0] sm:$0xff]
  %v1210 = vmul.f32 %v151, %v1189
  %v1211 = vmul.f32 %v155, %v1190
  %v1212 = vmul.f32 %v159, %v1191
  %v1213 = vmul.f32 %v163, %v1192
  %v1214 = vmul.f32 %v167, %v1193
  %v1215 = vmul.f32 %v171, %v1194
  %v1216 = vmul.f32 %v175, %v1195
  %v1217 = vmul.f32 %v179, %v1196
  %v1218 = vmul.f32 %v183, %v1197
  %v1219 = vmul.f32 %v187, %v1198
  %v1220 = vmul.f32 %v191, %v1199
  %v1221 = vmul.f32 %v195, %v1200
  %v1222 = vmul.f32 %v199, %v1201
  %v1223 = vmul.f32 %v203, %v1202
  %v1224 = vmul.f32 %v207, %v1203
  %v1225 = vmul.f32 %v211, %v1204
  %v1226 = vmul.f32 %v215, %v1205
  %v1227 = vmul.f32 %v219, %v1206
  %v1228 = vmul.f32 %v223, %v1207
  %v1229 = vmul.f32 %v227, %v1208
  %v1230 = vmul.f32 %v231, %v1209
  %v1231 = vadd.f32 %v1167, %v1210
  %v1232 = vadd.f32 %v1168, %v1211
  %v1233 = vadd.f32 %v1169, %v1212
  %v1234 = vadd.f32 %v1170, %v1213
  %v1235 = vadd.f32 %v1171, %v1214
  %v1236 = vadd.f32 %v1172, %v1215
  %v1237 = vadd.f32 %v1173, %v1216
  %v1238 = vadd.f32 %v1174, %v1217
  %v1239 = vadd.f32 %v1175, %v1218
  %v1240 = vadd.f32 %v1176, %v1219
  %v1241 = vadd.f32 %v1177, %v1220
  %v1242 = vadd.f32 %v1178, %v1221
  %v1243 = vadd.f32 %v1179, %v1222
  %v1244 = vadd.f32 %v1180, %v1223
  %v1245 = vadd.f32 %v1181, %v1224
  %v1246 = vadd.f32 %v1182, %v1225
  %v1247 = vadd.f32 %v1183, %v1226
  %v1248 = vadd.f32 %v1184, %v1227
  %v1249 = vadd.f32 %v1185, %v1228
  %v1250 = vadd.f32 %v1186, %v1229
  %v1251 = vadd.f32 %v1187, %v1230
  %s1252 = scalar_lea.vmem %s1, 1680
  %v1253 = vld [vmem:[%s1252] sm:$0xff]
  %v1254 = vld [vmem:[%s1252 + $0x8] sm:$0xff]
  %v1255 = vld [vmem:[%s1252 + $0x10] sm:$0xff]
  %v1256 = vld [vmem:[%s1252 + $0x18] sm:$0xff]
  %v1257 = vld [vmem:[%s1252 + $0x20] sm:$0xff]
  %v1258 = vld [vmem:[%s1252 + $0x28] sm:$0xff]
  %v1259 = vld [vmem:[%s1252 + $0x30] sm:$0xff]
  %v1260 = vld [vmem:[%s1252 + $0x38] sm:$0xff]
  %v1261 = vld [vmem:[%s1252 + $0x40] sm:$0xff]
  %v1262 = vld [vmem:[%s1252 + $0x48] sm:$0xff]
  %v1263 = vld [vmem:[%s1252 + $0x50] sm:$0xff]
  %v1264 = vld [vmem:[%s1252 + $0x58] sm:$0xff]
  %v1265 = vld [vmem:[%s1252 + $0x60] sm:$0xff]
  %v1266 = vld [vmem:[%s1252 + $0x68] sm:$0xff]
  %v1267 = vld [vmem:[%s1252 + $0x70] sm:$0xff]
  %v1268 = vld [vmem:[%s1252 + $0x78] sm:$0xff]
  %v1269 = vld [vmem:[%s1252 + $0x80] sm:$0xff]
  %v1270 = vld [vmem:[%s1252 + $0x88] sm:$0xff]
  %v1271 = vld [vmem:[%s1252 + $0x90] sm:$0xff]
  %v1272 = vld [vmem:[%s1252 + $0x98] sm:$0xff]
  %v1273 = vld [vmem:[%s1252 + $0xa0] sm:$0xff]
  %v1274 = vmul.f32 %v235, %v1253
  %v1275 = vmul.f32 %v239, %v1254
  %v1276 = vmul.f32 %v243, %v1255
  %v1277 = vmul.f32 %v247, %v1256
  %v1278 = vmul.f32 %v251, %v1257
  %v1279 = vmul.f32 %v255, %v1258
  %v1280 = vmul.f32 %v259, %v1259
  %v1281 = vmul.f32 %v263, %v1260
  %v1282 = vmul.f32 %v267, %v1261
  %v1283 = vmul.f32 %v271, %v1262
  %v1284 = vmul.f32 %v275, %v1263
  %v1285 = vmul.f32 %v279, %v1264
  %v1286 = vmul.f32 %v283, %v1265
  %v1287 = vmul.f32 %v287, %v1266
  %v1288 = vmul.f32 %v291, %v1267
  %v1289 = vmul.f32 %v295, %v1268
  %v1290 = vmul.f32 %v299, %v1269
  %v1291 = vmul.f32 %v303, %v1270
  %v1292 = vmul.f32 %v307, %v1271
  %v1293 = vmul.f32 %v311, %v1272
  %v1294 = vmul.f32 %v315, %v1273
  %v1295 = vadd.f32 %v1231, %v1274
  %v1296 = vadd.f32 %v1232, %v1275
  %v1297 = vadd.f32 %v1233, %v1276
  %v1298 = vadd.f32 %v1234, %v1277
  %v1299 = vadd.f32 %v1235, %v1278
  %v1300 = vadd.f32 %v1236, %v1279
  %v1301 = vadd.f32 %v1237, %v1280
  %v1302 = vadd.f32 %v1238, %v1281
  %v1303 = vadd.f32 %v1239, %v1282
  %v1304 = vadd.f32 %v1240, %v1283
  %v1305 = vadd.f32 %v1241, %v1284
  %v1306 = vadd.f32 %v1242, %v1285
  %v1307 = vadd.f32 %v1243, %v1286
  %v1308 = vadd.f32 %v1244, %v1287
  %v1309 = vadd.f32 %v1245, %v1288
  %v1310 = vadd.f32 %v1246, %v1289
  %v1311 = vadd.f32 %v1247, %v1290
  %v1312 = vadd.f32 %v1248, %v1291
  %v1313 = vadd.f32 %v1249, %v1292
  %v1314 = vadd.f32 %v1250, %v1293
  %v1315 = vadd.f32 %v1251, %v1294
  %s1316 = scalar_lea.vmem %s1, 1848
  %v1317 = vld [vmem:[%s1316] sm:$0xff]
  %v1318 = vld [vmem:[%s1316 + $0x8] sm:$0xff]
  %v1319 = vld [vmem:[%s1316 + $0x10] sm:$0xff]
  %v1320 = vld [vmem:[%s1316 + $0x18] sm:$0xff]
  %v1321 = vld [vmem:[%s1316 + $0x20] sm:$0xff]
  %v1322 = vld [vmem:[%s1316 + $0x28] sm:$0xff]
  %v1323 = vld [vmem:[%s1316 + $0x30] sm:$0xff]
  %v1324 = vld [vmem:[%s1316 + $0x38] sm:$0xff]
  %v1325 = vld [vmem:[%s1316 + $0x40] sm:$0xff]
  %v1326 = vld [vmem:[%s1316 + $0x48] sm:$0xff]
  %v1327 = vld [vmem:[%s1316 + $0x50] sm:$0xff]
  %v1328 = vld [vmem:[%s1316 + $0x58] sm:$0xff]
  %v1329 = vld [vmem:[%s1316 + $0x60] sm:$0xff]
  %v1330 = vld [vmem:[%s1316 + $0x68] sm:$0xff]
  %v1331 = vld [vmem:[%s1316 + $0x70] sm:$0xff]
  %v1332 = vld [vmem:[%s1316 + $0x78] sm:$0xff]
  %v1333 = vld [vmem:[%s1316 + $0x80] sm:$0xff]
  %v1334 = vld [vmem:[%s1316 + $0x88] sm:$0xff]
  %v1335 = vld [vmem:[%s1316 + $0x90] sm:$0xff]
  %v1336 = vld [vmem:[%s1316 + $0x98] sm:$0xff]
  %v1337 = vld [vmem:[%s1316 + $0xa0] sm:$0xff]
  %v1338 = vmul.f32 %v319, %v1317
  %v1339 = vmul.f32 %v323, %v1318
  %v1340 = vmul.f32 %v327, %v1319
  %v1341 = vmul.f32 %v331, %v1320
  %v1342 = vmul.f32 %v335, %v1321
  %v1343 = vmul.f32 %v339, %v1322
  %v1344 = vmul.f32 %v343, %v1323
  %v1345 = vmul.f32 %v347, %v1324
  %v1346 = vmul.f32 %v351, %v1325
  %v1347 = vmul.f32 %v355, %v1326
  %v1348 = vmul.f32 %v359, %v1327
  %v1349 = vmul.f32 %v363, %v1328
  %v1350 = vmul.f32 %v367, %v1329
  %v1351 = vmul.f32 %v371, %v1330
  %v1352 = vmul.f32 %v375, %v1331
  %v1353 = vmul.f32 %v379, %v1332
  %v1354 = vmul.f32 %v383, %v1333
  %v1355 = vmul.f32 %v387, %v1334
  %v1356 = vmul.f32 %v391, %v1335
  %v1357 = vmul.f32 %v395, %v1336
  %v1358 = vmul.f32 %v399, %v1337
  %v1359 = vadd.f32 %v1295, %v1338
  %v1360 = vadd.f32 %v1296, %v1339
  %v1361 = vadd.f32 %v1297, %v1340
  %v1362 = vadd.f32 %v1298, %v1341
  %v1363 = vadd.f32 %v1299, %v1342
  %v1364 = vadd.f32 %v1300, %v1343
  %v1365 = vadd.f32 %v1301, %v1344
  %v1366 = vadd.f32 %v1302, %v1345
  %v1367 = vadd.f32 %v1303, %v1346
  %v1368 = vadd.f32 %v1304, %v1347
  %v1369 = vadd.f32 %v1305, %v1348
  %v1370 = vadd.f32 %v1306, %v1349
  %v1371 = vadd.f32 %v1307, %v1350
  %v1372 = vadd.f32 %v1308, %v1351
  %v1373 = vadd.f32 %v1309, %v1352
  %v1374 = vadd.f32 %v1310, %v1353
  %v1375 = vadd.f32 %v1311, %v1354
  %v1376 = vadd.f32 %v1312, %v1355
  %v1377 = vadd.f32 %v1313, %v1356
  %v1378 = vadd.f32 %v1314, %v1357
  %v1379 = vadd.f32 %v1315, %v1358
  %v1380 = vxor.u32 %v1359, 2147483648
  %v1381 = vxor.u32 %v1360, 2147483648
  %v1382 = vxor.u32 %v1361, 2147483648
  %v1383 = vxor.u32 %v1362, 2147483648
  %v1384 = vxor.u32 %v1363, 2147483648
  %v1385 = vxor.u32 %v1364, 2147483648
  %v1386 = vxor.u32 %v1365, 2147483648
  %v1387 = vxor.u32 %v1366, 2147483648
  %v1388 = vxor.u32 %v1367, 2147483648
  %v1389 = vxor.u32 %v1368, 2147483648
  %v1390 = vxor.u32 %v1369, 2147483648
  %v1391 = vxor.u32 %v1370, 2147483648
  %v1392 = vxor.u32 %v1371, 2147483648
  %v1393 = vxor.u32 %v1372, 2147483648
  %v1394 = vxor.u32 %v1373, 2147483648
  %v1395 = vxor.u32 %v1374, 2147483648
  %v1396 = vxor.u32 %v1375, 2147483648
  %v1397 = vxor.u32 %v1376, 2147483648
  %v1398 = vxor.u32 %v1377, 2147483648
  %v1399 = vxor.u32 %v1378, 2147483648
  %v1400 = vxor.u32 %v1379, 2147483648
  %v1401 = vmul.f32 %v1380, 1.442695
  %v1402 = vpow.pop %v1401
  %v1403 = vmul.f32 %v1381, 1.442695
  %v1404 = vpow.pop %v1403
  %v1405 = vmul.f32 %v1382, 1.442695
  %v1406 = vpow.pop %v1405
  %v1407 = vmul.f32 %v1383, 1.442695
  %v1408 = vpow.pop %v1407
  %v1409 = vmul.f32 %v1384, 1.442695
  %v1410 = vpow.pop %v1409
  %v1411 = vmul.f32 %v1385, 1.442695
  %v1412 = vpow.pop %v1411
  %v1413 = vmul.f32 %v1386, 1.442695
  %v1414 = vpow.pop %v1413
  %v1415 = vmul.f32 %v1387, 1.442695
  %v1416 = vpow.pop %v1415
  %v1417 = vmul.f32 %v1388, 1.442695
  %v1418 = vpow.pop %v1417
  %v1419 = vmul.f32 %v1389, 1.442695
  %v1420 = vpow.pop %v1419
  %v1421 = vmul.f32 %v1390, 1.442695
  %v1422 = vpow.pop %v1421
  %v1423 = vmul.f32 %v1391, 1.442695
  %v1424 = vpow.pop %v1423
  %v1425 = vmul.f32 %v1392, 1.442695
  %v1426 = vpow.pop %v1425
  %v1427 = vmul.f32 %v1393, 1.442695
  %v1428 = vpow.pop %v1427
  %v1429 = vmul.f32 %v1394, 1.442695
  %v1430 = vpow.pop %v1429
  %v1431 = vmul.f32 %v1395, 1.442695
  %v1432 = vpow.pop %v1431
  %v1433 = vmul.f32 %v1396, 1.442695
  %v1434 = vpow.pop %v1433
  %v1435 = vmul.f32 %v1397, 1.442695
  %v1436 = vpow.pop %v1435
  %v1437 = vmul.f32 %v1398, 1.442695
  %v1438 = vpow.pop %v1437
  %v1439 = vmul.f32 %v1399, 1.442695
  %v1440 = vpow.pop %v1439
  %v1441 = vmul.f32 %v1400, 1.442695
  %v1442 = vpow.pop %v1441
  %v1443 = vadd.f32 %v1402, 1.0
  %v1444 = vadd.f32 %v1404, 1.0
  %v1445 = vadd.f32 %v1406, 1.0
  %v1446 = vadd.f32 %v1408, 1.0
  %v1447 = vadd.f32 %v1410, 1.0
  %v1448 = vadd.f32 %v1412, 1.0
  %v1449 = vadd.f32 %v1414, 1.0
  %v1450 = vadd.f32 %v1416, 1.0
  %v1451 = vadd.f32 %v1418, 1.0
  %v1452 = vadd.f32 %v1420, 1.0
  %v1453 = vadd.f32 %v1422, 1.0
  %v1454 = vadd.f32 %v1424, 1.0
  %v1455 = vadd.f32 %v1426, 1.0
  %v1456 = vadd.f32 %v1428, 1.0
  %v1457 = vadd.f32 %v1430, 1.0
  %v1458 = vadd.f32 %v1432, 1.0
  %v1459 = vadd.f32 %v1434, 1.0
  %v1460 = vadd.f32 %v1436, 1.0
  %v1461 = vadd.f32 %v1438, 1.0
  %v1462 = vadd.f32 %v1440, 1.0
  %v1463 = vadd.f32 %v1442, 1.0
  %v1464 = vrcp.pop %v1443
  %v1465 = vmul.f32 1.0, %v1464
  %v1466 = vrcp.pop %v1444
  %v1467 = vmul.f32 1.0, %v1466
  %v1468 = vrcp.pop %v1445
  %v1469 = vmul.f32 1.0, %v1468
  %v1470 = vrcp.pop %v1446
  %v1471 = vmul.f32 1.0, %v1470
  %v1472 = vrcp.pop %v1447
  %v1473 = vmul.f32 1.0, %v1472
  %v1474 = vrcp.pop %v1448
  %v1475 = vmul.f32 1.0, %v1474
  %v1476 = vrcp.pop %v1449
  %v1477 = vmul.f32 1.0, %v1476
  %v1478 = vrcp.pop %v1450
  %v1479 = vmul.f32 1.0, %v1478
  %v1480 = vrcp.pop %v1451
  %v1481 = vmul.f32 1.0, %v1480
  %v1482 = vrcp.pop %v1452
  %v1483 = vmul.f32 1.0, %v1482
  %v1484 = vrcp.pop %v1453
  %v1485 = vmul.f32 1.0, %v1484
  %v1486 = vrcp.pop %v1454
  %v1487 = vmul.f32 1.0, %v1486
  %v1488 = vrcp.pop %v1455
  %v1489 = vmul.f32 1.0, %v1488
  %v1490 = vrcp.pop %v1456
  %v1491 = vmul.f32 1.0, %v1490
  %v1492 = vrcp.pop %v1457
  %v1493 = vmul.f32 1.0, %v1492
  %v1494 = vrcp.pop %v1458
  %v1495 = vmul.f32 1.0, %v1494
  %v1496 = vrcp.pop %v1459
  %v1497 = vmul.f32 1.0, %v1496
  %v1498 = vrcp.pop %v1460
  %v1499 = vmul.f32 1.0, %v1498
  %v1500 = vrcp.pop %v1461
  %v1501 = vmul.f32 1.0, %v1500
  %v1502 = vrcp.pop %v1462
  %v1503 = vmul.f32 1.0, %v1502
  %v1504 = vrcp.pop %v1463
  %v1505 = vmul.f32 1.0, %v1504
  %v1506 = vmul.f32 %v762, %v1081
  %v1507 = vmul.f32 %v764, %v1082
  %v1508 = vmul.f32 %v766, %v1083
  %v1509 = vmul.f32 %v768, %v1084
  %v1510 = vmul.f32 %v770, %v1085
  %v1511 = vmul.f32 %v772, %v1086
  %v1512 = vmul.f32 %v774, %v1087
  %v1513 = vmul.f32 %v776, %v1088
  %v1514 = vmul.f32 %v778, %v1089
  %v1515 = vmul.f32 %v780, %v1090
  %v1516 = vmul.f32 %v782, %v1091
  %v1517 = vmul.f32 %v784, %v1092
  %v1518 = vmul.f32 %v786, %v1093
  %v1519 = vmul.f32 %v788, %v1094
  %v1520 = vmul.f32 %v790, %v1095
  %v1521 = vmul.f32 %v792, %v1096
  %v1522 = vmul.f32 %v794, %v1097
  %v1523 = vmul.f32 %v796, %v1098
  %v1524 = vmul.f32 %v798, %v1099
  %v1525 = vmul.f32 %v800, %v1100
  %v1526 = vmul.f32 %v802, %v1101
  %v1527 = vtanh.pop %v1506
  %v1528 = vtanh.pop %v1507
  %v1529 = vtanh.pop %v1508
  %v1530 = vtanh.pop %v1509
  %v1531 = vtanh.pop %v1510
  %v1532 = vtanh.pop %v1511
  %v1533 = vtanh.pop %v1512
  %v1534 = vtanh.pop %v1513
  %v1535 = vtanh.pop %v1514
  %v1536 = vtanh.pop %v1515
  %v1537 = vtanh.pop %v1516
  %v1538 = vtanh.pop %v1517
  %v1539 = vtanh.pop %v1518
  %v1540 = vtanh.pop %v1519
  %v1541 = vtanh.pop %v1520
  %v1542 = vtanh.pop %v1521
  %v1543 = vtanh.pop %v1522
  %v1544 = vtanh.pop %v1523
  %v1545 = vtanh.pop %v1524
  %v1546 = vtanh.pop %v1525
  %v1547 = vtanh.pop %v1526
  %v1548 = vmul.f32 %v1465, %v1527
  %v1549 = vmul.f32 %v1467, %v1528
  %v1550 = vmul.f32 %v1469, %v1529
  %v1551 = vmul.f32 %v1471, %v1530
  %v1552 = vmul.f32 %v1473, %v1531
  %v1553 = vmul.f32 %v1475, %v1532
  %v1554 = vmul.f32 %v1477, %v1533
  %v1555 = vmul.f32 %v1479, %v1534
  %v1556 = vmul.f32 %v1481, %v1535
  %v1557 = vmul.f32 %v1483, %v1536
  %v1558 = vmul.f32 %v1485, %v1537
  %v1559 = vmul.f32 %v1487, %v1538
  %v1560 = vmul.f32 %v1489, %v1539
  %v1561 = vmul.f32 %v1491, %v1540
  %v1562 = vmul.f32 %v1493, %v1541
  %v1563 = vmul.f32 %v1495, %v1542
  %v1564 = vmul.f32 %v1497, %v1543
  %v1565 = vmul.f32 %v1499, %v1544
  %v1566 = vmul.f32 %v1501, %v1545
  %v1567 = vmul.f32 %v1503, %v1546
  %v1568 = vmul.f32 %v1505, %v1547
  %v1569 = vld [vmem:[%s3] sm:$0xff]
  %v1570 = vld [vmem:[%s3 + $0x8] sm:$0xff]
  %v1571 = vld [vmem:[%s3 + $0x10] sm:$0xff]
  %v1572 = vld [vmem:[%s3 + $0x18] sm:$0xff]
  %vm1573 = vcmask 326656
  %v1575 = vsel %vm1573, %v1570, 0
  %v1578 = vsel %vm1573, %v1572, 0
  %1580 = vmatprep.subr.mxu0 0.0
  %1581 = vmatpush1.msra.mxu0 %v1563
  %1582 = vmatprep.subr.mxu0 0.0
  %1583 = vmatpush1.msra.mxu0 %v1562
  %1584 = vmatprep.subr.mxu0 0.0
  %1585 = vmatpush1.msra.mxu0 %v1561
  %1586 = vmatprep.subr.mxu0 0.0
  %1587 = vmatpush1.msra.mxu0 %v1560
  %1588 = vmatprep.subr.mxu0 0.0
  %1589 = vmatpush1.msra.mxu0 %v1559
  %1590 = vmatprep.subr.mxu0 0.0
  %1591 = vmatpush1.msra.mxu0 %v1558
  %1592 = vmatprep.subr.mxu0 0.0
  %1593 = vmatpush1.msra.mxu0 %v1557
  %1594 = vmatprep.subr.mxu0 0.0
  %1595 = vmatpush1.msra.mxu0 %v1556
  %1596 = vmatprep.subr.mxu0 0.0
  %1597 = vmatpush1.msra.mxu0 %v1555
  %1598 = vmatprep.subr.mxu0 0.0
  %1599 = vmatpush1.msra.mxu0 %v1554
  %1600 = vmatprep.subr.mxu0 0.0
  %1601 = vmatpush1.msra.mxu0 %v1553
  %1602 = vmatprep.subr.mxu0 0.0
  %1603 = vmatpush1.msra.mxu0 %v1552
  %1604 = vmatprep.subr.mxu0 0.0
  %1605 = vmatpush1.msra.mxu0 %v1551
  %1606 = vmatprep.subr.mxu0 0.0
  %1607 = vmatpush1.msra.mxu0 %v1550
  %1608 = vmatprep.subr.mxu0 0.0
  %1609 = vmatpush1.msra.mxu0 %v1549
  %1610 = vmatprep.subr.mxu0 0.0
  %1611 = vmatpush1.msra.mxu0 %v1548
  %1612 = vmatprep.subr.mxu0 0.0
  %1613 = vmatpush2.msra.mxu0 0.0
  %1614 = vmatprep.subr.mxu0 0.0
  %1615 = vmatpush2.msra.mxu0 0.0
  %1616 = vmatprep.subr.mxu0 0.0
  %1617 = vmatpush2.msra.mxu0 0.0
  %1618 = vmatprep.subr.mxu0 0.0
  %1619 = vmatpush2.msra.mxu0 0.0
  %1620 = vmatprep.subr.mxu0 0.0
  %1621 = vmatpush2.msra.mxu0 0.0
  %1622 = vmatprep.subr.mxu0 0.0
  %1623 = vmatpush2.msra.mxu0 0.0
  %1624 = vmatprep.subr.mxu0 0.0
  %1625 = vmatpush2.msra.mxu0 0.0
  %1626 = vmatprep.subr.mxu0 0.0
  %1627 = vmatpush2.msra.mxu0 0.0
  %1628 = vmatprep.subr.mxu0 0.0
  %1629 = vmatpush2.msra.mxu0 0.0
  %1630 = vmatprep.subr.mxu0 0.0
  %1631 = vmatpush2.msra.mxu0 0.0
  %1632 = vmatprep.subr.mxu0 0.0
  %1633 = vmatpush2.msra.mxu0 0.0
  %1634 = vmatprep.subr.mxu0 0.0
  %1635 = vmatpush2.msra.mxu0 %v1568
  %1636 = vmatprep.subr.mxu0 0.0
  %1637 = vmatpush2.msra.mxu0 %v1567
  %1638 = vmatprep.subr.mxu0 0.0
  %1639 = vmatpush2.msra.mxu0 %v1566
  %1640 = vmatprep.subr.mxu0 0.0
  %1641 = vmatpush2.msra.mxu0 %v1565
  %1642 = vmatprep.subr.mxu0 0.0
  %1643 = vmatpush2.msra.mxu0 %v1564
  %1644 = vmatprep.mubr.f32.mxu0 %v1575
  %1645 = vmatmul.mubr.f32.gmra.mxu0 %v1569
  %v1646 = vpop.f32.mrf.mxu0
  %v1647 = vadd.f32 0.0, %v1646
  %v1648 = vpop.f32.mrf.mxu0
  %1649 = vmatprep.mubr.f32.mxu0 %v1578
  %1650 = vmatmul.mubr.f32.gmra.mxu0 %v1571
  %v1651 = vpop.f32.mrf.mxu0
  %v1652 = vadd.f32 0.0, %v1651
  %v1653 = vpop.f32.mrf.mxu0
  %1654 = vdwg.mxu0
  %v1655 = vld [vmem:[%s4] sm:$0xff]
  %v1656 = vld [vmem:[%s4 + $0x8] sm:$0xff]
  %v1657 = vld [vmem:[%s4 + $0x10] sm:$0xff]
  %v1658 = vld [vmem:[%s4 + $0x18] sm:$0xff]
  %v1659 = vld [vmem:[%s5] sm:$0x1]
  %v1661 = vlaneseq
  %v1662 = vshrl.u32 %v1661, 7
  %v1663 = vsub.s32 0, %v1662
  %v1664 = vrot.slane %v1659, %v1663
  %vm1666 = vcmask 261120
  %v1668 = vsel %vm1666, %v1647, 0
  %v1671 = vsel %vm1666, %v1652, 0
  %1673 = vmatprep.subr.mxu0 0.0
  %1674 = vmatpush1.msra.mxu0 0.0
  %1675 = vmatprep.subr.mxu0 0.0
  %1676 = vmatpush1.msra.mxu0 0.0
  %1677 = vmatprep.subr.mxu0 0.0
  %1678 = vmatpush1.msra.mxu0 0.0
  %1679 = vmatprep.subr.mxu0 0.0
  %1680 = vmatpush1.msra.mxu0 0.0
  %1681 = vmatprep.subr.mxu0 0.0
  %1682 = vmatpush1.msra.mxu0 0.0
  %1683 = vmatprep.subr.mxu0 0.0
  %1684 = vmatpush1.msra.mxu0 0.0
  %1685 = vmatprep.subr.mxu0 0.0
  %1686 = vmatpush1.msra.mxu0 0.0
  %1687 = vmatprep.subr.mxu0 0.0
  %1688 = vmatpush1.msra.mxu0 0.0
  %1689 = vmatprep.subr.mxu0 0.0
  %1690 = vmatpush1.msra.mxu0 0.0
  %1691 = vmatprep.subr.mxu0 0.0
  %1692 = vmatpush1.msra.mxu0 0.0
  %1693 = vmatprep.subr.mxu0 0.0
  %1694 = vmatpush1.msra.mxu0 0.0
  %1695 = vmatprep.subr.mxu0 0.0
  %1696 = vmatpush1.msra.mxu0 0.0
  %1697 = vmatprep.subr.mxu0 0.0
  %1698 = vmatpush1.msra.mxu0 %v1658
  %1699 = vmatprep.subr.mxu0 0.0
  %1700 = vmatpush1.msra.mxu0 %v1657
  %1701 = vmatprep.subr.mxu0 0.0
  %1702 = vmatpush1.msra.mxu0 %v1656
  %1703 = vmatprep.subr.mxu0 0.0
  %1704 = vmatpush1.msra.mxu0 %v1655
  %1705 = vmatprep.subr.mxu0 0.0
  %1706 = vmatpush2.msra.mxu0 0.0
  %1707 = vmatprep.subr.mxu0 0.0
  %1708 = vmatpush2.msra.mxu0 0.0
  %1709 = vmatprep.subr.mxu0 0.0
  %1710 = vmatpush2.msra.mxu0 0.0
  %1711 = vmatprep.subr.mxu0 0.0
  %1712 = vmatpush2.msra.mxu0 0.0
  %1713 = vmatprep.subr.mxu0 0.0
  %1714 = vmatpush2.msra.mxu0 0.0
  %1715 = vmatprep.subr.mxu0 0.0
  %1716 = vmatpush2.msra.mxu0 0.0
  %1717 = vmatprep.subr.mxu0 0.0
  %1718 = vmatpush2.msra.mxu0 0.0
  %1719 = vmatprep.subr.mxu0 0.0
  %1720 = vmatpush2.msra.mxu0 0.0
  %1721 = vmatprep.subr.mxu0 0.0
  %1722 = vmatpush2.msra.mxu0 0.0
  %1723 = vmatprep.subr.mxu0 0.0
  %1724 = vmatpush2.msra.mxu0 0.0
  %1725 = vmatprep.subr.mxu0 0.0
  %1726 = vmatpush2.msra.mxu0 0.0
  %1727 = vmatprep.subr.mxu0 0.0
  %1728 = vmatpush2.msra.mxu0 0.0
  %1729 = vmatprep.subr.mxu0 0.0
  %1730 = vmatpush2.msra.mxu0 0.0
  %1731 = vmatprep.subr.mxu0 0.0
  %1732 = vmatpush2.msra.mxu0 0.0
  %1733 = vmatprep.subr.mxu0 0.0
  %1734 = vmatpush2.msra.mxu0 0.0
  %1735 = vmatprep.subr.mxu0 0.0
  %1736 = vmatpush2.msra.mxu0 0.0
  %1737 = vmatprep.mubr.f32.mxu0 0.0
  %1738 = vmatmul.mubr.f32.gmra.mxu0 %v1668
  %v1739 = vpop.f32.mrf.mxu0
  %v1740 = vadd.f32 %v1664, %v1739
  %v1741 = vpop.f32.mrf.mxu0
  %1742 = vmatprep.mubr.f32.mxu0 0.0
  %1743 = vmatmul.mubr.f32.gmra.mxu0 %v1671
  %v1744 = vpop.f32.mrf.mxu0
  %v1745 = vadd.f32 %v1664, %v1744
  %v1746 = vpop.f32.mrf.mxu0
  %1747 = vdwg.mxu0
  %vm1748 = vcmask 31744
  %1749 = vst.msk [vmem:[%s6] sm:$0xff] %vm1748, %v1740
  %1750 = vst.msk [vmem:[%s6 + $0x8] sm:$0xff] %vm1748, %v1745
  // Predicated region
  $region26: #{tpu_custom_call.1} parent=0 // pred_check
    _
  $region27: #{tpu_custom_call.1} parent=0 // pred_check_branch
    %1752 = sbr.rel (0) target = $region29
  $region28: #{tpu_custom_call.1} parent=0 // pred_region
    _
  $region29: #{tpu_custom_call.1} parent=0 // pred_fallthru
    _
  // Predicated region
  $region30: #{tpu_custom_call.1} parent=0 // pred_check
    _
  $region31: #{tpu_custom_call.1} parent=0 // pred_check_branch
    %1754 = sbr.rel (0) target = $region33
  $region32: #{tpu_custom_call.1} parent=0 // pred_region
    _
  $region33: #{tpu_custom_call.1} parent=0 // pred_fallthru
    _

</llo_original>
